<compile_context>
chip_gen: v7x
topology: tpu7x:2x2x1
jax: 0.10.0
libtpu: 0.0.40
codegen_flags: <defaults>
</compile_context>

<pallas_src>
import jax
import jax.numpy as jnp
from jax.experimental import pallas as pl
from jax.experimental.pallas import tpu as pltpu


def _round_up(n, m):
    return ((n + m - 1) // m) * m


def _const_index_map(ndim):
    # Fresh closure per spec (avoids late-binding bugs); the block index never
    # changes, so Pallas keeps the operand resident in VMEM across grid steps.
    return lambda i: (0,) * ndim


def make_mlp_kernel(num_mid, mid_stacked, reduce_last, in_dim, vpu_first):
    """Fused feature-major MLP kernel body.

    All activations are (features, tile_n): features on sublanes, batch on the
    lane axis.  Ref order (no scratch):
      xT, w0, b0,
      [w_mid_stack, b_mid_stack]        if mid_stacked
      [w_mid_0, b_mid_0, ...]           otherwise (num_mid pairs)
      w_last, b_last, outT
    Weights are PyTorch-orientation (out_features, in_features); biases are
    (out_features, 1) columns.  Every layer is h <- W @ h + b; hidden layers
    apply sin(), the final layer is pure affine.
    """

    def affine(w, h, b):
        return jnp.dot(w, h, preferred_element_type=jnp.float32) + b

    def kernel(*refs):
        x_ref, out_ref = refs[0], refs[-1]
        p = refs[1:-1]

        xT = x_ref[...].astype(jnp.float32)           # (in_dim, tile_n)
        w0, b0 = p[0][...], p[1][...]                 # (h0, in_dim), (h0, 1)

        # First hidden layer.  For tiny in_dim the contraction (K = in_dim) is
        # a terrible MXU fit, so do it as in_dim rank-1 VPU multiply-adds.
        if vpu_first:
            acc = w0[:, 0:1] * xT[0:1, :] + b0
            for k in range(1, in_dim):
                acc = acc + w0[:, k:k + 1] * xT[k:k + 1, :]
            h = jnp.sin(acc)
        else:
            h = jnp.sin(affine(w0, xT, b0))

        # Middle hidden layers (sin), statically unrolled.
        if mid_stacked:
            wm_ref, bm_ref = p[2], p[3]
            for i in range(num_mid):
                h = jnp.sin(affine(wm_ref[i], h, bm_ref[i]))
            wl_ref, bl_ref = p[4], p[5]
        else:
            for i in range(num_mid):
                h = jnp.sin(affine(p[2 + 2 * i][...], h, p[3 + 2 * i][...]))
            wl_ref, bl_ref = p[2 + 2 * num_mid], p[3 + 2 * num_mid]

        # Final linear layer (no activation); result is lane-dense
        # (out_dim, tile_n).
        if reduce_last:
            # w_last arrives as an (hidden, 1) column; a sublane reduction on
            # VPU/XLU beats an M=1 (almost entirely padded) MXU pass.
            y = jnp.sum(h * wl_ref[...], axis=0, keepdims=True) + bl_ref[...]
        else:
            y = affine(wl_ref[...], h, bl_ref[...])

        out_ref[...] = y.astype(out_ref.dtype)

    return kernel


def net_forward(x, weights, biases, *, tile_n=1024):
    """Pallas forward pass of Net (all-f32, feature-major).

    x:       (N, layers[0])
    weights: list of PyTorch-orientation weights, weights[i]: (layers[i+1], layers[i])
    biases:  list of (layers[i+1],)
    tile_n:  batch columns per grid step; rounded up to a multiple of 128 and
             capped so the grid has >= 2 steps when the batch allows it
             (keeps both v7x TensorCores busy).
    returns: (N, layers[-1])
    """
    num_layers = len(weights)
    assert num_layers >= 2, "expected at least one hidden (sin) layer"
    n, in_dim = x.shape
    assert weights[0].shape[1] == in_dim
    out_dim = weights[-1].shape[0]
    num_mid = num_layers - 2

    # --- batch tiling: batch is the lane axis -> tile_n multiple of 128 ------
    tile_n = _round_up(max(128, tile_n), 128)
    tile_n = min(tile_n, _round_up(n, 128))                       # no huge overshoot
    tile_n = min(tile_n, max(128, _round_up(pl.cdiv(n, 2), 128)))  # >=2 steps (v7x)
    n_pad = _round_up(n, tile_n)
    grid = (n_pad // tile_n,)

    # Feature-major input (in_dim, n_pad).  x is only in_dim*N floats, so this
    # transpose (+ pad of the last ragged tile only) is a negligible XLA op,
    # not an extra pass over the main data.
    xT = x.T if n_pad == n else jnp.pad(x.T, ((0, 0), (0, n_pad - n)))

    # --- pack parameters (PyTorch orientation, biases as columns) ------------
    mid_w = weights[1:-1]
    mid_b = biases[1:-1]
    mid_stacked = num_mid > 0 and len({w.shape for w in mid_w}) == 1
    reduce_last = out_dim == 1
    vpu_first = in_dim <= 8

    args = [xT, weights[0], biases[0].reshape(-1, 1)]
    if mid_stacked:
        args.append(jnp.stack(mid_w))                               # (L, h, h)
        args.append(jnp.stack([b.reshape(-1, 1) for b in mid_b]))   # (L, h, 1)
    else:
        for w, b in zip(mid_w, mid_b):
            args += [w, b.reshape(-1, 1)]
    # A (1, hidden) final weight reshaped to (hidden, 1) is exactly its transpose.
    w_last = weights[-1].reshape(-1, 1) if reduce_last else weights[-1]
    args += [w_last, biases[-1].reshape(-1, 1)]

    # --- block specs: x/out tiled over the lane (batch) axis, params resident.
    # Note: constant-index params could also use pipeline_mode=pl.Buffered(1)
    # to drop their redundant second buffer; omitted as it is a minor win.
    in_specs = [pl.BlockSpec((in_dim, tile_n), lambda i: (0, i))]
    for a in args[1:]:
        in_specs.append(pl.BlockSpec(a.shape, _const_index_map(a.ndim)))
    out_specs = pl.BlockSpec((out_dim, tile_n), lambda i: (0, i))

    # --- advisory cost estimate for XLA scheduling around this custom call ---
    flops = 2 * n_pad * sum(w.shape[0] * w.shape[1] for w in weights)
    transcendentals = n_pad * sum(w.shape[0] for w in weights[:-1])   # sin()
    bytes_accessed = 4 * (n_pad * (in_dim + out_dim)
                          + sum(w.size for w in weights)
                          + sum(b.size for b in biases))

    kernel = make_mlp_kernel(num_mid, mid_stacked, reduce_last, in_dim, vpu_first)
    outT = pl.pallas_call(
        kernel,
        out_shape=jax.ShapeDtypeStruct((out_dim, n_pad), x.dtype),
        grid=grid,
        in_specs=in_specs,
        out_specs=out_specs,
        compiler_params=pltpu.CompilerParams(
            dimension_semantics=("parallel",)),   # v7x: shard steps over 2 TCs
        cost_estimate=pl.CostEstimate(
            flops=flops,
            transcendentals=transcendentals,
            bytes_accessed=bytes_accessed),
    )(*args)

    if n_pad != n:
        outT = outT[:, :n]
    # (1, n) -> (n, 1) is a free reshape; general out_dim needs a transpose.
    return outT.reshape(n, 1) if reduce_last else outT.T


def init_params(layers, key):
    """Deterministic init mimicking torch.nn.Linear default (U[-k, k], k=1/sqrt(fan_in)).

    Weights are stored in PyTorch orientation (out_features, in_features).
    """
    weights, biases = [], []
    for i in range(len(layers) - 1):
        fan_in, fan_out = layers[i], layers[i + 1]
        k = 1.0 / jnp.sqrt(jnp.float32(fan_in))
        key, kw, kb = jax.random.split(key, 3)
        weights.append(jax.random.uniform(kw, (fan_out, fan_in), jnp.float32, -k, k))
        biases.append(jax.random.uniform(kb, (fan_out,), jnp.float32, -k, k))
    return weights, biases


def reference_forward(x, weights, biases):
    """Pure-JAX reference matching Net.forward semantics (PyTorch weights)."""
    h = x
    for i in range(len(weights) - 1):   # layers_hid_num hidden layers -> sin
        h = jnp.sin(h @ weights[i].T + biases[i])
    return h @ weights[-1].T + biases[-1]


if __name__ == "__main__":
    # Net(layers=[2, 32, 32, 32, 1]) -> 3 hidden (sin) layers + final linear.
    layers = [2, 32, 32, 32, 1]

    key = jax.random.PRNGKey(0)
    key, kx_small, kx_big = jax.random.split(key, 3)
    weights, biases = init_params(layers, key)

    # Small batch: single grid step (padded to one 128-wide lane tile).
    x_small = jax.random.normal(kx_small, (8, layers[0]), jnp.float32)
    out_small = jax.block_until_ready(net_forward(x_small, weights, biases))
    ref_small = reference_forward(x_small, weights, biases)
    assert out_small.shape == (8, layers[-1])
    assert jnp.allclose(out_small, ref_small, atol=1e-5, rtol=1e-5)

    # Multi-step grid + ragged batch: 300 rows with tile_n=128 -> 3 grid steps,
    # exercises resident weight blocks and the pad/slice path.
    x_big = jax.random.normal(kx_big, (300, layers[0]), jnp.float32)
    out_big = jax.block_until_ready(net_forward(x_big, weights, biases, tile_n=128))
    ref_big = reference_forward(x_big, weights, biases)
    assert out_big.shape == (300, layers[-1])
    assert jnp.allclose(out_big, ref_big, atol=1e-5, rtol=1e-5)

    print("KERNEL_OK")
</pallas_src>

<mosaic_0001>
module attributes {stable_mosaic.version = 11 : i64} {
  func.func @kernel(%arg0: i32, %arg1: memref<2x128xf32, #tpu.memory_space<vmem>>, %arg2: memref<32x2xf32, #tpu.memory_space<vmem>>, %arg3: memref<32x1xf32, #tpu.memory_space<vmem>>, %arg4: memref<2x32x32xf32, #tpu.memory_space<vmem>>, %arg5: memref<2x32x1xf32, #tpu.memory_space<vmem>>, %arg6: memref<32x1xf32, #tpu.memory_space<vmem>>, %arg7: memref<1x1xf32, #tpu.memory_space<vmem>>, %arg8: memref<1x128xf32, #tpu.memory_space<vmem>>) attributes {dimension_semantics = [#tpu.dimension_semantics<parallel>], iteration_bounds = array<i64: 1>, scalar_prefetch = 0 : i64, scratch_operands = 0 : i64, tpu.core_type = #tpu.core_type<tc>, window_params = [{transform_indices = @transform_0, window_bounds = array<i64: 2, 128>}, {pipeline_mode = #tpu.pipeline_mode<synchronous>, transform_indices = @transform_1, window_bounds = array<i64: 32, 2>}, {pipeline_mode = #tpu.pipeline_mode<synchronous>, transform_indices = @transform_2, window_bounds = array<i64: 32, 1>}, {pipeline_mode = #tpu.pipeline_mode<synchronous>, transform_indices = @transform_3, window_bounds = array<i64: 2, 32, 32>}, {pipeline_mode = #tpu.pipeline_mode<synchronous>, transform_indices = @transform_4, window_bounds = array<i64: 2, 32, 1>}, {pipeline_mode = #tpu.pipeline_mode<synchronous>, transform_indices = @transform_5, window_bounds = array<i64: 32, 1>}, {pipeline_mode = #tpu.pipeline_mode<synchronous>, transform_indices = @transform_6, window_bounds = array<i64: 1, 1>}, {transform_indices = @transform_7, window_bounds = array<i64: 1, 128>}]} {
    %c0 = arith.constant 0 : index
    %c0_0 = arith.constant 0 : index
    %0 = vector.load %arg1[%c0, %c0_0] : memref<2x128xf32, #tpu.memory_space<vmem>>, vector<2x128xf32>
    %c0_1 = arith.constant 0 : index
    %c0_2 = arith.constant 0 : index
    %1 = vector.load %arg2[%c0_1, %c0_2] : memref<32x2xf32, #tpu.memory_space<vmem>>, vector<32x2xf32>
    %c0_3 = arith.constant 0 : index
    %c0_4 = arith.constant 0 : index
    %2 = vector.load %arg3[%c0_3, %c0_4] : memref<32x1xf32, #tpu.memory_space<vmem>>, vector<32x1xf32>
    %3 = vector.extract_strided_slice %1 {offsets = [0, 0], sizes = [32, 1], strides = [1, 1]} : vector<32x2xf32> to vector<32x1xf32>
    %4 = vector.extract_strided_slice %0 {offsets = [0, 0], sizes = [1, 128], strides = [1, 1]} : vector<2x128xf32> to vector<1x128xf32>
    %5 = vector.broadcast %3 : vector<32x1xf32> to vector<32x128xf32>
    %6 = vector.broadcast %4 : vector<1x128xf32> to vector<32x128xf32>
    %7 = arith.mulf %5, %6 : vector<32x128xf32>
    %8 = vector.broadcast %2 : vector<32x1xf32> to vector<32x128xf32>
    %9 = arith.addf %7, %8 : vector<32x128xf32>
    %10 = vector.extract_strided_slice %1 {offsets = [0, 1], sizes = [32, 1], strides = [1, 1]} : vector<32x2xf32> to vector<32x1xf32>
    %11 = vector.extract_strided_slice %0 {offsets = [1, 0], sizes = [1, 128], strides = [1, 1]} : vector<2x128xf32> to vector<1x128xf32>
    %12 = vector.broadcast %10 : vector<32x1xf32> to vector<32x128xf32>
    %13 = vector.broadcast %11 : vector<1x128xf32> to vector<32x128xf32>
    %14 = arith.mulf %12, %13 : vector<32x128xf32>
    %15 = arith.addf %9, %14 : vector<32x128xf32>
    %16 = math.sin %15 : vector<32x128xf32>
    %c0_5 = arith.constant 0 : index
    %c0_6 = arith.constant 0 : index
    %c0_7 = arith.constant 0 : index
    %17 = vector.load %arg4[%c0_5, %c0_6, %c0_7] : memref<2x32x32xf32, #tpu.memory_space<vmem>>, vector<1x32x32xf32>
    %18 = vector.shape_cast %17 : vector<1x32x32xf32> to vector<32x32xf32>
    %c0_8 = arith.constant 0 : index
    %c0_9 = arith.constant 0 : index
    %c0_10 = arith.constant 0 : index
    %19 = vector.load %arg5[%c0_8, %c0_9, %c0_10] : memref<2x32x1xf32, #tpu.memory_space<vmem>>, vector<1x32x1xf32>
    %20 = vector.shape_cast %19 : vector<1x32x1xf32> to vector<32x1xf32>
    %cst = arith.constant dense<0.000000e+00> : vector<32x128xf32>
    %21 = tpu.matmul %18, %16, %cst {dimension_numbers = #tpu.dot_dimension_numbers<[1], [0], [0], [1], [0, 0, 1, 1], [], []>} : vector<32x32xf32>, vector<32x128xf32>, vector<32x128xf32> -> vector<32x128xf32>
    %22 = vector.broadcast %20 : vector<32x1xf32> to vector<32x128xf32>
    %23 = arith.addf %21, %22 : vector<32x128xf32>
    %24 = math.sin %23 : vector<32x128xf32>
    %c1 = arith.constant 1 : index
    %c0_11 = arith.constant 0 : index
    %c0_12 = arith.constant 0 : index
    %25 = vector.load %arg4[%c1, %c0_11, %c0_12] : memref<2x32x32xf32, #tpu.memory_space<vmem>>, vector<1x32x32xf32>
    %26 = vector.shape_cast %25 : vector<1x32x32xf32> to vector<32x32xf32>
    %c1_13 = arith.constant 1 : index
    %c0_14 = arith.constant 0 : index
    %c0_15 = arith.constant 0 : index
    %27 = vector.load %arg5[%c1_13, %c0_14, %c0_15] : memref<2x32x1xf32, #tpu.memory_space<vmem>>, vector<1x32x1xf32>
    %28 = vector.shape_cast %27 : vector<1x32x1xf32> to vector<32x1xf32>
    %cst_16 = arith.constant dense<0.000000e+00> : vector<32x128xf32>
    %29 = tpu.matmul %26, %24, %cst_16 {dimension_numbers = #tpu.dot_dimension_numbers<[1], [0], [0], [1], [0, 0, 1, 1], [], []>} : vector<32x32xf32>, vector<32x128xf32>, vector<32x128xf32> -> vector<32x128xf32>
    %30 = vector.broadcast %28 : vector<32x1xf32> to vector<32x128xf32>
    %31 = arith.addf %29, %30 : vector<32x128xf32>
    %32 = math.sin %31 : vector<32x128xf32>
    %c0_17 = arith.constant 0 : index
    %c0_18 = arith.constant 0 : index
    %33 = vector.load %arg6[%c0_17, %c0_18] : memref<32x1xf32, #tpu.memory_space<vmem>>, vector<32x1xf32>
    %34 = vector.broadcast %33 : vector<32x1xf32> to vector<32x128xf32>
    %35 = arith.mulf %32, %34 : vector<32x128xf32>
    %cst_19 = arith.constant dense<0.000000e+00> : vector<128xf32>
    %36 = vector.multi_reduction <add>, %35, %cst_19 [0] : vector<32x128xf32> to vector<128xf32>
    %37 = vector.shape_cast %36 : vector<128xf32> to vector<1x128xf32>
    %c0_20 = arith.constant 0 : index
    %c0_21 = arith.constant 0 : index
    %38 = vector.load %arg7[%c0_20, %c0_21] : memref<1x1xf32, #tpu.memory_space<vmem>>, vector<1x1xf32>
    %39 = vector.broadcast %38 : vector<1x1xf32> to vector<1x128xf32>
    %40 = arith.addf %37, %39 : vector<1x128xf32>
    %c0_22 = arith.constant 0 : index
    %c0_23 = arith.constant 0 : index
    %41 = vector.load %arg8[%c0_22, %c0_23] : memref<1x128xf32, #tpu.memory_space<vmem>>, vector<1x128xf32>
    tpu.vector_store %arg8[%c0_22, %c0_23], %40 {strides = array<i32>} : memref<1x128xf32, #tpu.memory_space<vmem>>, vector<1x128xf32>,
    return
  }
  func.func @transform_0(%arg0: i32) -> (i32, i32) {
    %c0_i32 = arith.constant 0 : i32
    %c0_i32_0 = arith.constant 0 : i32
    return %c0_i32, %arg0 : i32, i32
  }
  func.func @transform_1(%arg0: i32) -> (i32, i32) {
    %c0_i32 = arith.constant 0 : i32
    %c0_i32_0 = arith.constant 0 : i32
    %c0_i32_1 = arith.constant 0 : i32
    return %c0_i32, %c0_i32_0 : i32, i32
  }
  func.func @transform_2(%arg0: i32) -> (i32, i32) {
    %c0_i32 = arith.constant 0 : i32
    %c0_i32_0 = arith.constant 0 : i32
    %c0_i32_1 = arith.constant 0 : i32
    return %c0_i32, %c0_i32_0 : i32, i32
  }
  func.func @transform_3(%arg0: i32) -> (i32, i32, i32) {
    %c0_i32 = arith.constant 0 : i32
    %c0_i32_0 = arith.constant 0 : i32
    %c0_i32_1 = arith.constant 0 : i32
    %c0_i32_2 = arith.constant 0 : i32
    return %c0_i32, %c0_i32_0, %c0_i32_1 : i32, i32, i32
  }
  func.func @transform_4(%arg0: i32) -> (i32, i32, i32) {
    %c0_i32 = arith.constant 0 : i32
    %c0_i32_0 = arith.constant 0 : i32
    %c0_i32_1 = arith.constant 0 : i32
    %c0_i32_2 = arith.constant 0 : i32
    return %c0_i32, %c0_i32_0, %c0_i32_1 : i32, i32, i32
  }
  func.func @transform_5(%arg0: i32) -> (i32, i32) {
    %c0_i32 = arith.constant 0 : i32
    %c0_i32_0 = arith.constant 0 : i32
    %c0_i32_1 = arith.constant 0 : i32
    return %c0_i32, %c0_i32_0 : i32, i32
  }
  func.func @transform_6(%arg0: i32) -> (i32, i32) {
    %c0_i32 = arith.constant 0 : i32
    %c0_i32_0 = arith.constant 0 : i32
    %c0_i32_1 = arith.constant 0 : i32
    return %c0_i32, %c0_i32_0 : i32, i32
  }
  func.func @transform_7(%arg0: i32) -> (i32, i32) {
    %c0_i32 = arith.constant 0 : i32
    %c0_i32_0 = arith.constant 0 : i32
    return %c0_i32, %arg0 : i32, i32
  }
}

</mosaic_0001>

<llo_original>
// kernel: tpu_custom_call.1
$region0: #{tpu_custom_call.1}
  #allocation0 [shape = 'u32[]', space=smem, size = 0x4, offset = 0x4, fixed_abs, tag = 'smem constant byte address 0x4 - core index']
  #allocation1 [shape = 'u32[144,128]{1,0:T(1,128)}', space=vmem, size = 0x12000, scoped, tag = 'internal scratch']
  #allocation2 [shape = 'f32[1,1]{1,0:T(1,128)S(1)}', space=vmem, size = 0x200, scoped, tag = 'scoped memory for tpu_custom_call.1']
  %s0 = inlined_call_operand.vmem [shape: f32[2,128], index: 0, kind: input, shape index: {}]
  %s1 = inlined_call_operand.vmem [shape: f32[32,2], index: 1, kind: input, shape index: {}]
  %s2 = inlined_call_operand.vmem [shape: f32[32,1], index: 2, kind: input, shape index: {}]
  %s3 = inlined_call_operand.vmem [shape: f32[2,32,32], index: 3, kind: input, shape index: {}]
  %s4 = inlined_call_operand.vmem [shape: f32[2,32,1], index: 4, kind: input, shape index: {}]
  %s5 = inlined_call_operand.vmem [shape: f32[32,1], index: 5, kind: input, shape index: {}]
  %s6 = inlined_call_operand.<no memory space> [shape: f32[1,1], index: 6, kind: input, shape index: {}]
  %s7 = inlined_call_operand.hbm [shape: f32[1,128], index: 7, kind: output, shape index: {}]
  %s8 = sld [smem:[#allocation0]]
  $region38: #{tpu_custom_call.1} parent=0
    _
  %s10 = ssub.s32 1, %s8
  %s11 = scalar_select 0, %s10, %s8
  %v12 = vstv %s6
  %13 = vst [vmem:[#allocation2] sm:$0x1] %v12
  $region1: #{tpu_custom_call.1} parent=0
    #allocation3 [shape = 'u8[512]{0}', space=vmem, size = 0x400, scoped, tag = 'output window, operand 0, single buffered']
    #allocation4 [shape = 's32[1]{0}', space=sflag, size = 0x4, scoped, tag = 'scoped memory for tpu_custom_call.1']
    %14 = vsyncpa [#allocation4], 0
    // Predicated region
    $region2: #{tpu_custom_call.1} parent=1 // pred_check
      _
    $region3: #{tpu_custom_call.1} parent=1 // pred_check_branch
      %16 = sbr.rel (0) target = $region5
    $region4: #{tpu_custom_call.1} parent=1 // pred_region
      _
    $region5: #{tpu_custom_call.1} parent=1 // pred_fallthru
      _
    // Predicated region
    $region6: #{tpu_custom_call.1} parent=1 // pred_check
      _
    $region7: #{tpu_custom_call.1} parent=1 // pred_check_branch
      %18 = sbr.rel (0) target = $region9
    $region8: #{tpu_custom_call.1} parent=1 // pred_region
      _
    $region9: #{tpu_custom_call.1} parent=1 // pred_fallthru
      _
    // Predicated region
    $region10: #{tpu_custom_call.1} parent=1 // pred_check
      _
    $region11: #{tpu_custom_call.1} parent=1 // pred_check_branch
      %20 = sbr.rel (0) target = $region13
    $region12: #{tpu_custom_call.1} parent=1 // pred_region
      _
    $region13: #{tpu_custom_call.1} parent=1 // pred_fallthru
      _
    // Predicated region
    $region14: #{tpu_custom_call.1} parent=1 // pred_check
      _
    $region15: #{tpu_custom_call.1} parent=1 // pred_check_branch
      %22 = sbr.rel (0) target = $region17
    $region16: #{tpu_custom_call.1} parent=1 // pred_region
      _
    $region17: #{tpu_custom_call.1} parent=1 // pred_fallthru
      _
    // Predicated region
    $region18: #{tpu_custom_call.1} parent=1 // pred_check
      _
    $region19: #{tpu_custom_call.1} parent=1 // pred_check_branch
      %24 = sbr.rel (0) target = $region21
    $region20: #{tpu_custom_call.1} parent=1 // pred_region
      _
    $region21: #{tpu_custom_call.1} parent=1 // pred_fallthru
      _
    // Predicated region
    $region22: #{tpu_custom_call.1} parent=1 // pred_check
      _
    $region23: #{tpu_custom_call.1} parent=1 // pred_check_branch
      %26 = sbr.rel (0) target = $region25
    $region24: #{tpu_custom_call.1} parent=1 // pred_region
      _
    $region25: #{tpu_custom_call.1} parent=1 // pred_fallthru
      _
    // Predicated region
    $region26: #{tpu_custom_call.1} parent=1 // pred_check
      _
    $region27: #{tpu_custom_call.1} parent=1 // pred_check_branch
      %28 = sbr.rel (0) target = $region29
    $region28: #{tpu_custom_call.1} parent=1 // pred_region
      _
    $region29: #{tpu_custom_call.1} parent=1 // pred_fallthru
      _
    %v29 = vld [vmem:[%s0] sm:$0x3]
    %v30 = vld [vmem:[%s1] sm:$0xff]
    %v31 = vld [vmem:[%s1 + $0x8] sm:$0xff]
    %v32 = vld [vmem:[%s1 + $0x10] sm:$0xff]
    %v33 = vld [vmem:[%s1 + $0x18] sm:$0xff]
    %v34 = vld [vmem:[%s2] sm:$0xff]
    %v35 = vld [vmem:[%s2 + $0x8] sm:$0xff]
    %v36 = vld [vmem:[%s2 + $0x10] sm:$0xff]
    %v37 = vld [vmem:[%s2 + $0x18] sm:$0xff]
    %39 = vset.pattern.permute.xlu0 0
    %40 = vperm.xlu0 %39, %v30
    %v41 = vpop.permute.xlu0 %40
    %44 = vset.pattern.permute.xlu0 0
    %45 = vperm.xlu0 %44, %v31
    %v46 = vpop.permute.xlu0 %45
    %49 = vset.pattern.permute.xlu0 0
    %50 = vperm.xlu0 %49, %v32
    %v51 = vpop.permute.xlu0 %50
    %54 = vset.pattern.permute.xlu0 0
    %55 = vperm.xlu0 %54, %v33
    %v56 = vpop.permute.xlu0 %55
    %v58 = vlaneseq
    %v59 = vshrl.u32 %v58, 7
    %v60 = vsub.s32 0, %v59
    %v61 = vrot.slane %v29, %v60
    %v62 = vmul.f32 %v41, %v61
    %v63 = vmul.f32 %v46, %v61
    %v64 = vmul.f32 %v51, %v61
    %v65 = vmul.f32 %v56, %v61
    %67 = vset.pattern.permute.xlu0 0
    %68 = vperm.xlu0 %67, %v34
    %v69 = vpop.permute.xlu0 %68
    %72 = vset.pattern.permute.xlu0 0
    %73 = vperm.xlu0 %72, %v35
    %v74 = vpop.permute.xlu0 %73
    %77 = vset.pattern.permute.xlu0 0
    %78 = vperm.xlu0 %77, %v36
    %v79 = vpop.permute.xlu0 %78
    %82 = vset.pattern.permute.xlu0 0
    %83 = vperm.xlu0 %82, %v37
    %v84 = vpop.permute.xlu0 %83
    %v86 = vadd.f32 %v62, %v69
    %v87 = vadd.f32 %v63, %v74
    %v88 = vadd.f32 %v64, %v79
    %v89 = vadd.f32 %v65, %v84
    %90 = vset.pattern.permute.xlu0 1
    %91 = vperm.xlu0 %90, %v30
    %v92 = vpop.permute.xlu0 %91
    %94 = vset.pattern.permute.xlu0 1
    %95 = vperm.xlu0 %94, %v31
    %v96 = vpop.permute.xlu0 %95
    %98 = vset.pattern.permute.xlu0 1
    %99 = vperm.xlu0 %98, %v32
    %v100 = vpop.permute.xlu0 %99
    %102 = vset.pattern.permute.xlu0 1
    %103 = vperm.xlu0 %102, %v33
    %v104 = vpop.permute.xlu0 %103
    %v106 = vlaneseq
    %v107 = vshrl.u32 %v106, 7
    %v108 = vsub.s32 1, %v107
    %v109 = vrot.slane %v29, %v108
    %v110 = vmul.f32 %v92, %v109
    %v111 = vmul.f32 %v96, %v109
    %v112 = vmul.f32 %v100, %v109
    %v113 = vmul.f32 %v104, %v109
    %v114 = vadd.f32 %v86, %v110
    %v115 = vadd.f32 %v87, %v111
    %v116 = vadd.f32 %v88, %v112
    %v117 = vadd.f32 %v89, %v113
    %v118 = vand.u32 2147483647, %v114
    %vm119 = vcmp.le.f32.partialorder %v118, 0.7853982
    %vm120 = vcmp.lt.s32.totalorder %v114, 0
    %v121 = vand.u32 %v114, 2139095040
    %v122 = vshrl.u32 %v121, 23
    %v123 = vsub.s32 %v122, 127
    %v124 = vand.u32 2147483647, %v114
    %v125 = vand.u32 %v124, 8388607
    %v126 = vor.u32 %v125, 8388608
    %v127 = vsub.s32 0, %v126
    %v128 = vadd.s32 %v123, 1
    %vm129 = vcmp.gt.s32.totalorder %v128, 0
    %v130 = vsel %vm129, %v128, 0
    %v131 = vshrl.u32 %v130, 5
    %v132 = vand.u32 %v130, 31
    %v133 = vsub.s32 32, %v132
    %v134 = vshrl.u32 683565275, %v133
    %v135 = vshll.u32 683565275, %v132
    %v136 = vshrl.u32 2475754826, %v133
    %v137 = vor.u32 %v135, %v136
    %v138 = vshll.u32 2475754826, %v132
    %v139 = vshrl.u32 2131351028, %v133
    %v140 = vor.u32 %v138, %v139
    %v141 = vshll.u32 2131351028, %v132
    %v142 = vshrl.u32 2102212464, %v133
    %v143 = vor.u32 %v141, %v142
    %v144 = vshll.u32 2102212464, %v132
    %v145 = vshrl.u32 920167782, %v133
    %v146 = vor.u32 %v144, %v145
    %v147 = vshll.u32 920167782, %v132
    %v148 = vshrl.u32 1326507024, %v133
    %v149 = vor.u32 %v147, %v148
    %vm150 = vcmp.lt.s32.totalorder %v131, 1
    %vm151 = vcmp.lt.s32.totalorder %v131, 2
    %vm152 = vcmp.lt.s32.totalorder %v131, 3
    %vm153 = vcmp.lt.s32.totalorder %v131, 4
    %v154 = vsel %vm150, %v134, %v137
    %v155 = vsel %vm153, %v143, 2102212464
    %v156 = vsel %vm152, %v140, %v155
    %v157 = vsel %vm151, %v154, %v156
    %v158 = vsel %vm150, %v137, %v140
    %v159 = vsel %vm153, %v146, 920167782
    %v160 = vsel %vm152, %v143, %v159
    %v161 = vsel %vm151, %v158, %v160
    %v162 = vsel %vm150, %v140, %v143
    %v163 = vsel %vm153, %v149, 1326507024
    %v164 = vsel %vm152, %v146, %v163
    %v165 = vsel %vm151, %v162, %v164
    %v166 = vshll.u32 %v126, 8
    %v167 = vmul.u32.u64.compose %v166, %v165
    %v168 = vextract.low.u32 %v167
    %v169 = vextract.high.u32 %v167
    %v170 = vmul.u32.u64.compose %v166, %v161
    %v171 = vextract.low.u32 %v170
    %v172 = vextract.high.u32 %v170
    %v173 = vmul.u32 %v166, %v157
    %v174 = vadd.s32 %v169, %v171
    %vm175 = vc.u32 %v169, %v171
    %v176 = vadd.s32 %v172, 1
    %v177 = vsel %vm175, %v176, %v172
    %v178 = vadd.s32 %v173, %v177
    %v179 = vadd.s32 %v178, 536870912
    %v180 = vshrl.u32 %v179, 30
    %v181 = vshll.u32 %v180, 30
    %v182 = vsub.s32 %v178, %v181
    %vm183 = vcmp.lt.s32.totalorder %v182, 0
    %v184 = vsub.s32 0, %v182
    %v185 = vsel %vm183, %v184, %v182
    %v186 = vclz %v185
    %v187 = vsub.s32 %v186, 2
    %vm188 = vcmp.gt.s32.totalorder 0, %v187
    %v189 = vsel %vm188, 0, %v187
    %v190 = vsub.s32 32, %v189
    %v191 = vshll.u32 %v182, %v189
    %v192 = vshrl.u32 %v174, %v190
    %v193 = vor.u32 %v191, %v192
    %v194 = vsub.s32 4294967266, %v189
    %v195 = vadd.s32 %v194, 127
    %v196 = vshll.u32 %v195, 23
    %v197 = vor.u32 4788187, %v196
    %v198 = vand.u32 2147483647, %v197
    %v200 = vcvt.s32.f32 %v193
    %v201 = vmul.f32 %v200, %v198
    %v202 = vxor.u32 %v201, 2147483648
    %v203 = vsel %vm120, %v202, %v201
    %v204 = vsub.s32 4, %v180
    %v205 = vsel %vm120, %v204, %v180
    %v206 = vsel %vm119, %v114, %v203
    %v207 = vsel %vm119, 0, %v205
    %v208 = vcosq.f32.pop %v206
    %v209 = vsinq.f32.pop %v206
    %vm210 = vweird.f32 %v114
    %v211 = vadd.s32 %v207, 3
    %v212 = vand.u32 %v211, 3
    %vm213 = vcmp.lt.s32.totalorder %v212, 2
    %vm214 = vcmp.eq.s32.totalorder %v212, 0
    %v215 = vxor.u32 %v209, 2147483648
    %v216 = vsel %vm214, %v208, %v215
    %vm217 = vcmp.eq.s32.totalorder %v212, 2
    %v218 = vxor.u32 %v208, 2147483648
    %v219 = vsel %vm217, %v218, %v209
    %v220 = vsel %vm213, %v216, %v219
    %v221 = vsel %vm210, nan, %v220
    %v222 = vand.u32 2147483647, %v115
    %vm223 = vcmp.le.f32.partialorder %v222, 0.7853982
    %vm224 = vcmp.lt.s32.totalorder %v115, 0
    %v225 = vand.u32 %v115, 2139095040
    %v226 = vshrl.u32 %v225, 23
    %v227 = vsub.s32 %v226, 127
    %v228 = vand.u32 2147483647, %v115
    %v229 = vand.u32 %v228, 8388607
    %v230 = vor.u32 %v229, 8388608
    %v231 = vsub.s32 0, %v230
    %v232 = vadd.s32 %v227, 1
    %vm233 = vcmp.gt.s32.totalorder %v232, 0
    %v234 = vsel %vm233, %v232, 0
    %v235 = vshrl.u32 %v234, 5
    %v236 = vand.u32 %v234, 31
    %v237 = vsub.s32 32, %v236
    %v238 = vshrl.u32 683565275, %v237
    %v239 = vshll.u32 683565275, %v236
    %v240 = vshrl.u32 2475754826, %v237
    %v241 = vor.u32 %v239, %v240
    %v242 = vshll.u32 2475754826, %v236
    %v243 = vshrl.u32 2131351028, %v237
    %v244 = vor.u32 %v242, %v243
    %v245 = vshll.u32 2131351028, %v236
    %v246 = vshrl.u32 2102212464, %v237
    %v247 = vor.u32 %v245, %v246
    %v248 = vshll.u32 2102212464, %v236
    %v249 = vshrl.u32 920167782, %v237
    %v250 = vor.u32 %v248, %v249
    %v251 = vshll.u32 920167782, %v236
    %v252 = vshrl.u32 1326507024, %v237
    %v253 = vor.u32 %v251, %v252
    %vm254 = vcmp.lt.s32.totalorder %v235, 1
    %vm255 = vcmp.lt.s32.totalorder %v235, 2
    %vm256 = vcmp.lt.s32.totalorder %v235, 3
    %vm257 = vcmp.lt.s32.totalorder %v235, 4
    %v258 = vsel %vm254, %v238, %v241
    %v259 = vsel %vm257, %v247, 2102212464
    %v260 = vsel %vm256, %v244, %v259
    %v261 = vsel %vm255, %v258, %v260
    %v262 = vsel %vm254, %v241, %v244
    %v263 = vsel %vm257, %v250, 920167782
    %v264 = vsel %vm256, %v247, %v263
    %v265 = vsel %vm255, %v262, %v264
    %v266 = vsel %vm254, %v244, %v247
    %v267 = vsel %vm257, %v253, 1326507024
    %v268 = vsel %vm256, %v250, %v267
    %v269 = vsel %vm255, %v266, %v268
    %v270 = vshll.u32 %v230, 8
    %v271 = vmul.u32.u64.compose %v270, %v269
    %v272 = vextract.low.u32 %v271
    %v273 = vextract.high.u32 %v271
    %v274 = vmul.u32.u64.compose %v270, %v265
    %v275 = vextract.low.u32 %v274
    %v276 = vextract.high.u32 %v274
    %v277 = vmul.u32 %v270, %v261
    %v278 = vadd.s32 %v273, %v275
    %vm279 = vc.u32 %v273, %v275
    %v280 = vadd.s32 %v276, 1
    %v281 = vsel %vm279, %v280, %v276
    %v282 = vadd.s32 %v277, %v281
    %v283 = vadd.s32 %v282, 536870912
    %v284 = vshrl.u32 %v283, 30
    %v285 = vshll.u32 %v284, 30
    %v286 = vsub.s32 %v282, %v285
    %vm287 = vcmp.lt.s32.totalorder %v286, 0
    %v288 = vsub.s32 0, %v286
    %v289 = vsel %vm287, %v288, %v286
    %v290 = vclz %v289
    %v291 = vsub.s32 %v290, 2
    %vm292 = vcmp.gt.s32.totalorder 0, %v291
    %v293 = vsel %vm292, 0, %v291
    %v294 = vsub.s32 32, %v293
    %v295 = vshll.u32 %v286, %v293
    %v296 = vshrl.u32 %v278, %v294
    %v297 = vor.u32 %v295, %v296
    %v298 = vsub.s32 4294967266, %v293
    %v299 = vadd.s32 %v298, 127
    %v300 = vshll.u32 %v299, 23
    %v301 = vor.u32 4788187, %v300
    %v302 = vand.u32 2147483647, %v301
    %v304 = vcvt.s32.f32 %v297
    %v305 = vmul.f32 %v304, %v302
    %v306 = vxor.u32 %v305, 2147483648
    %v307 = vsel %vm224, %v306, %v305
    %v308 = vsub.s32 4, %v284
    %v309 = vsel %vm224, %v308, %v284
    %v310 = vsel %vm223, %v115, %v307
    %v311 = vsel %vm223, 0, %v309
    %v312 = vcosq.f32.pop %v310
    %v313 = vsinq.f32.pop %v310
    %vm314 = vweird.f32 %v115
    %v315 = vadd.s32 %v311, 3
    %v316 = vand.u32 %v315, 3
    %vm317 = vcmp.lt.s32.totalorder %v316, 2
    %vm318 = vcmp.eq.s32.totalorder %v316, 0
    %v319 = vxor.u32 %v313, 2147483648
    %v320 = vsel %vm318, %v312, %v319
    %vm321 = vcmp.eq.s32.totalorder %v316, 2
    %v322 = vxor.u32 %v312, 2147483648
    %v323 = vsel %vm321, %v322, %v313
    %v324 = vsel %vm317, %v320, %v323
    %v325 = vsel %vm314, nan, %v324
    %v326 = vand.u32 2147483647, %v116
    %vm327 = vcmp.le.f32.partialorder %v326, 0.7853982
    %vm328 = vcmp.lt.s32.totalorder %v116, 0
    %v329 = vand.u32 %v116, 2139095040
    %v330 = vshrl.u32 %v329, 23
    %v331 = vsub.s32 %v330, 127
    %v332 = vand.u32 2147483647, %v116
    %v333 = vand.u32 %v332, 8388607
    %v334 = vor.u32 %v333, 8388608
    %v335 = vsub.s32 0, %v334
    %v336 = vadd.s32 %v331, 1
    %vm337 = vcmp.gt.s32.totalorder %v336, 0
    %v338 = vsel %vm337, %v336, 0
    %v339 = vshrl.u32 %v338, 5
    %v340 = vand.u32 %v338, 31
    %v341 = vsub.s32 32, %v340
    %v342 = vshrl.u32 683565275, %v341
    %v343 = vshll.u32 683565275, %v340
    %v344 = vshrl.u32 2475754826, %v341
    %v345 = vor.u32 %v343, %v344
    %v346 = vshll.u32 2475754826, %v340
    %v347 = vshrl.u32 2131351028, %v341
    %v348 = vor.u32 %v346, %v347
    %v349 = vshll.u32 2131351028, %v340
    %v350 = vshrl.u32 2102212464, %v341
    %v351 = vor.u32 %v349, %v350
    %v352 = vshll.u32 2102212464, %v340
    %v353 = vshrl.u32 920167782, %v341
    %v354 = vor.u32 %v352, %v353
    %v355 = vshll.u32 920167782, %v340
    %v356 = vshrl.u32 1326507024, %v341
    %v357 = vor.u32 %v355, %v356
    %vm358 = vcmp.lt.s32.totalorder %v339, 1
    %vm359 = vcmp.lt.s32.totalorder %v339, 2
    %vm360 = vcmp.lt.s32.totalorder %v339, 3
    %vm361 = vcmp.lt.s32.totalorder %v339, 4
    %v362 = vsel %vm358, %v342, %v345
    %v363 = vsel %vm361, %v351, 2102212464
    %v364 = vsel %vm360, %v348, %v363
    %v365 = vsel %vm359, %v362, %v364
    %v366 = vsel %vm358, %v345, %v348
    %v367 = vsel %vm361, %v354, 920167782
    %v368 = vsel %vm360, %v351, %v367
    %v369 = vsel %vm359, %v366, %v368
    %v370 = vsel %vm358, %v348, %v351
    %v371 = vsel %vm361, %v357, 1326507024
    %v372 = vsel %vm360, %v354, %v371
    %v373 = vsel %vm359, %v370, %v372
    %v374 = vshll.u32 %v334, 8
    %v375 = vmul.u32.u64.compose %v374, %v373
    %v376 = vextract.low.u32 %v375
    %v377 = vextract.high.u32 %v375
    %v378 = vmul.u32.u64.compose %v374, %v369
    %v379 = vextract.low.u32 %v378
    %v380 = vextract.high.u32 %v378
    %v381 = vmul.u32 %v374, %v365
    %v382 = vadd.s32 %v377, %v379
    %vm383 = vc.u32 %v377, %v379
    %v384 = vadd.s32 %v380, 1
    %v385 = vsel %vm383, %v384, %v380
    %v386 = vadd.s32 %v381, %v385
    %v387 = vadd.s32 %v386, 536870912
    %v388 = vshrl.u32 %v387, 30
    %v389 = vshll.u32 %v388, 30
    %v390 = vsub.s32 %v386, %v389
    %vm391 = vcmp.lt.s32.totalorder %v390, 0
    %v392 = vsub.s32 0, %v390
    %v393 = vsel %vm391, %v392, %v390
    %v394 = vclz %v393
    %v395 = vsub.s32 %v394, 2
    %vm396 = vcmp.gt.s32.totalorder 0, %v395
    %v397 = vsel %vm396, 0, %v395
    %v398 = vsub.s32 32, %v397
    %v399 = vshll.u32 %v390, %v397
    %v400 = vshrl.u32 %v382, %v398
    %v401 = vor.u32 %v399, %v400
    %v402 = vsub.s32 4294967266, %v397
    %v403 = vadd.s32 %v402, 127
    %v404 = vshll.u32 %v403, 23
    %v405 = vor.u32 4788187, %v404
    %v406 = vand.u32 2147483647, %v405
    %v408 = vcvt.s32.f32 %v401
    %v409 = vmul.f32 %v408, %v406
    %v410 = vxor.u32 %v409, 2147483648
    %v411 = vsel %vm328, %v410, %v409
    %v412 = vsub.s32 4, %v388
    %v413 = vsel %vm328, %v412, %v388
    %v414 = vsel %vm327, %v116, %v411
    %v415 = vsel %vm327, 0, %v413
    %v416 = vcosq.f32.pop %v414
    %v417 = vsinq.f32.pop %v414
    %vm418 = vweird.f32 %v116
    %v419 = vadd.s32 %v415, 3
    %v420 = vand.u32 %v419, 3
    %vm421 = vcmp.lt.s32.totalorder %v420, 2
    %vm422 = vcmp.eq.s32.totalorder %v420, 0
    %v423 = vxor.u32 %v417, 2147483648
    %v424 = vsel %vm422, %v416, %v423
    %vm425 = vcmp.eq.s32.totalorder %v420, 2
    %v426 = vxor.u32 %v416, 2147483648
    %v427 = vsel %vm425, %v426, %v417
    %v428 = vsel %vm421, %v424, %v427
    %v429 = vsel %vm418, nan, %v428
    %v430 = vand.u32 2147483647, %v117
    %vm431 = vcmp.le.f32.partialorder %v430, 0.7853982
    %vm432 = vcmp.lt.s32.totalorder %v117, 0
    %v433 = vand.u32 %v117, 2139095040
    %v434 = vshrl.u32 %v433, 23
    %v435 = vsub.s32 %v434, 127
    %v436 = vand.u32 2147483647, %v117
    %v437 = vand.u32 %v436, 8388607
    %v438 = vor.u32 %v437, 8388608
    %v439 = vsub.s32 0, %v438
    %v440 = vadd.s32 %v435, 1
    %vm441 = vcmp.gt.s32.totalorder %v440, 0
    %v442 = vsel %vm441, %v440, 0
    %v443 = vshrl.u32 %v442, 5
    %v444 = vand.u32 %v442, 31
    %v445 = vsub.s32 32, %v444
    %v446 = vshrl.u32 683565275, %v445
    %v447 = vshll.u32 683565275, %v444
    %v448 = vshrl.u32 2475754826, %v445
    %v449 = vor.u32 %v447, %v448
    %v450 = vshll.u32 2475754826, %v444
    %v451 = vshrl.u32 2131351028, %v445
    %v452 = vor.u32 %v450, %v451
    %v453 = vshll.u32 2131351028, %v444
    %v454 = vshrl.u32 2102212464, %v445
    %v455 = vor.u32 %v453, %v454
    %v456 = vshll.u32 2102212464, %v444
    %v457 = vshrl.u32 920167782, %v445
    %v458 = vor.u32 %v456, %v457
    %v459 = vshll.u32 920167782, %v444
    %v460 = vshrl.u32 1326507024, %v445
    %v461 = vor.u32 %v459, %v460
    %vm462 = vcmp.lt.s32.totalorder %v443, 1
    %vm463 = vcmp.lt.s32.totalorder %v443, 2
    %vm464 = vcmp.lt.s32.totalorder %v443, 3
    %vm465 = vcmp.lt.s32.totalorder %v443, 4
    %v466 = vsel %vm462, %v446, %v449
    %v467 = vsel %vm465, %v455, 2102212464
    %v468 = vsel %vm464, %v452, %v467
    %v469 = vsel %vm463, %v466, %v468
    %v470 = vsel %vm462, %v449, %v452
    %v471 = vsel %vm465, %v458, 920167782
    %v472 = vsel %vm464, %v455, %v471
    %v473 = vsel %vm463, %v470, %v472
    %v474 = vsel %vm462, %v452, %v455
    %v475 = vsel %vm465, %v461, 1326507024
    %v476 = vsel %vm464, %v458, %v475
    %v477 = vsel %vm463, %v474, %v476
    %v478 = vshll.u32 %v438, 8
    %v479 = vmul.u32.u64.compose %v478, %v477
    %v480 = vextract.low.u32 %v479
    %v481 = vextract.high.u32 %v479
    %v482 = vmul.u32.u64.compose %v478, %v473
    %v483 = vextract.low.u32 %v482
    %v484 = vextract.high.u32 %v482
    %v485 = vmul.u32 %v478, %v469
    %v486 = vadd.s32 %v481, %v483
    %vm487 = vc.u32 %v481, %v483
    %v488 = vadd.s32 %v484, 1
    %v489 = vsel %vm487, %v488, %v484
    %v490 = vadd.s32 %v485, %v489
    %v491 = vadd.s32 %v490, 536870912
    %v492 = vshrl.u32 %v491, 30
    %v493 = vshll.u32 %v492, 30
    %v494 = vsub.s32 %v490, %v493
    %vm495 = vcmp.lt.s32.totalorder %v494, 0
    %v496 = vsub.s32 0, %v494
    %v497 = vsel %vm495, %v496, %v494
    %v498 = vclz %v497
    %v499 = vsub.s32 %v498, 2
    %vm500 = vcmp.gt.s32.totalorder 0, %v499
    %v501 = vsel %vm500, 0, %v499
    %v502 = vsub.s32 32, %v501
    %v503 = vshll.u32 %v494, %v501
    %v504 = vshrl.u32 %v486, %v502
    %v505 = vor.u32 %v503, %v504
    %v506 = vsub.s32 4294967266, %v501
    %v507 = vadd.s32 %v506, 127
    %v508 = vshll.u32 %v507, 23
    %v509 = vor.u32 4788187, %v508
    %v510 = vand.u32 2147483647, %v509
    %v512 = vcvt.s32.f32 %v505
    %v513 = vmul.f32 %v512, %v510
    %v514 = vxor.u32 %v513, 2147483648
    %v515 = vsel %vm432, %v514, %v513
    %v516 = vsub.s32 4, %v492
    %v517 = vsel %vm432, %v516, %v492
    %v518 = vsel %vm431, %v117, %v515
    %v519 = vsel %vm431, 0, %v517
    %v520 = vcosq.f32.pop %v518
    %v521 = vsinq.f32.pop %v518
    %vm522 = vweird.f32 %v117
    %v523 = vadd.s32 %v519, 3
    %v524 = vand.u32 %v523, 3
    %vm525 = vcmp.lt.s32.totalorder %v524, 2
    %vm526 = vcmp.eq.s32.totalorder %v524, 0
    %v527 = vxor.u32 %v521, 2147483648
    %v528 = vsel %vm526, %v520, %v527
    %vm529 = vcmp.eq.s32.totalorder %v524, 2
    %v530 = vxor.u32 %v520, 2147483648
    %v531 = vsel %vm529, %v530, %v521
    %v532 = vsel %vm525, %v528, %v531
    %v533 = vsel %vm522, nan, %v532
    %v534 = vld [vmem:[%s3] sm:$0xff]
    %v535 = vld [vmem:[%s3 + $0x8] sm:$0xff]
    %v536 = vld [vmem:[%s3 + $0x10] sm:$0xff]
    %v537 = vld [vmem:[%s3 + $0x18] sm:$0xff]
    %v538 = vld [vmem:[%s4] sm:$0xff]
    %v539 = vld [vmem:[%s4 + $0x8] sm:$0xff]
    %v540 = vld [vmem:[%s4 + $0x10] sm:$0xff]
    %v541 = vld [vmem:[%s4 + $0x18] sm:$0xff]
    %543 = vset.pattern.permute.xlu0 0
    %544 = vperm.xlu0 %543, %v538
    %v545 = vpop.permute.xlu0 %544
    %548 = vset.pattern.permute.xlu0 0
    %549 = vperm.xlu0 %548, %v539
    %v550 = vpop.permute.xlu0 %549
    %553 = vset.pattern.permute.xlu0 0
    %554 = vperm.xlu0 %553, %v540
    %v555 = vpop.permute.xlu0 %554
    %558 = vset.pattern.permute.xlu0 0
    %559 = vperm.xlu0 %558, %v541
    %v560 = vpop.permute.xlu0 %559
    %vm562 = vcmask 261120
    %v564 = vsel %vm562, %v534, 0
    %v567 = vsel %vm562, %v535, 0
    %v570 = vsel %vm562, %v536, 0
    %v573 = vsel %vm562, %v537, 0
    %575 = vmatprep.subr.mxu0 0.0
    %576 = vmatpush1.msra.mxu0 %v221
    %577 = vmatprep.subr.mxu0 0.0
    %578 = vmatpush1.msra.mxu0 %v325
    %579 = vmatprep.subr.mxu0 0.0
    %580 = vmatpush1.msra.mxu0 %v429
    %581 = vmatprep.subr.mxu0 0.0
    %582 = vmatpush1.msra.mxu0 %v533
    %583 = vmatprep.subr.mxu0 0.0
    %584 = vmatpush1.msra.mxu0 0.0
    %585 = vmatprep.subr.mxu0 0.0
    %586 = vmatpush1.msra.mxu0 0.0
    %587 = vmatprep.subr.mxu0 0.0
    %588 = vmatpush1.msra.mxu0 0.0
    %589 = vmatprep.subr.mxu0 0.0
    %590 = vmatpush1.msra.mxu0 0.0
    %591 = vmatprep.subr.mxu0 0.0
    %592 = vmatpush1.msra.mxu0 0.0
    %593 = vmatprep.subr.mxu0 0.0
    %594 = vmatpush1.msra.mxu0 0.0
    %595 = vmatprep.subr.mxu0 0.0
    %596 = vmatpush1.msra.mxu0 0.0
    %597 = vmatprep.subr.mxu0 0.0
    %598 = vmatpush1.msra.mxu0 0.0
    %599 = vmatprep.subr.mxu0 0.0
    %600 = vmatpush1.msra.mxu0 0.0
    %601 = vmatprep.subr.mxu0 0.0
    %602 = vmatpush1.msra.mxu0 0.0
    %603 = vmatprep.subr.mxu0 0.0
    %604 = vmatpush1.msra.mxu0 0.0
    %605 = vmatprep.subr.mxu0 0.0
    %606 = vmatpush1.msra.mxu0 0.0
    %607 = vmatprep.subr.mxu0 0.0
    %608 = vmatpush1.msra.mxu0 0.0
    %609 = vmatprep.subr.mxu0 0.0
    %610 = vmatpush1.msra.mxu0 0.0
    %611 = vmatprep.subr.mxu0 0.0
    %612 = vmatpush1.msra.mxu0 0.0
    %613 = vmatprep.subr.mxu0 0.0
    %614 = vmatpush1.msra.mxu0 0.0
    %615 = vmatprep.subr.mxu0 0.0
    %616 = vmatpush1.msra.mxu0 0.0
    %617 = vmatprep.subr.mxu0 0.0
    %618 = vmatpush1.msra.mxu0 0.0
    %619 = vmatprep.subr.mxu0 0.0
    %620 = vmatpush1.msra.mxu0 0.0
    %621 = vmatprep.subr.mxu0 0.0
    %622 = vmatpush1.msra.mxu0 0.0
    %623 = vmatprep.subr.mxu0 0.0
    %624 = vmatpush1.msra.mxu0 0.0
    %625 = vmatprep.subr.mxu0 0.0
    %626 = vmatpush1.msra.mxu0 0.0
    %627 = vmatprep.subr.mxu0 0.0
    %628 = vmatpush1.msra.mxu0 0.0
    %629 = vmatprep.subr.mxu0 0.0
    %630 = vmatpush1.msra.mxu0 0.0
    %631 = vmatprep.subr.mxu0 0.0
    %632 = vmatpush1.msra.mxu0 0.0
    %633 = vmatprep.subr.mxu0 0.0
    %634 = vmatpush1.msra.mxu0 0.0
    %635 = vmatprep.subr.mxu0 0.0
    %636 = vmatpush1.msra.mxu0 0.0
    %637 = vmatprep.subr.mxu0 0.0
    %638 = vmatpush1.msra.mxu0 0.0
    %639 = vmatprep.mubr.f32.mxu0 0.0
    %640 = vmatmul.mubr.f32.gmra.mrb[0].mxu0 %v564
    %v641 = vpop.f32.mrb[0].mxu0
    %v642 = vadd.f32 %v545, %v641
    %v643 = vpop.f32.mrb[0].mxu0
    %644 = vmatprep.mubr.f32.mxu0 0.0
    %645 = vmatmul.mubr.f32.gmra.mrb[0].mxu0 %v567
    %v646 = vpop.f32.mrb[0].mxu0
    %v647 = vadd.f32 %v550, %v646
    %v648 = vpop.f32.mrb[0].mxu0
    %649 = vmatprep.mubr.f32.mxu0 0.0
    %650 = vmatmul.mubr.f32.gmra.mrb[0].mxu0 %v570
    %v651 = vpop.f32.mrb[0].mxu0
    %v652 = vadd.f32 %v555, %v651
    %v653 = vpop.f32.mrb[0].mxu0
    %654 = vmatprep.mubr.f32.mxu0 0.0
    %655 = vmatmul.mubr.f32.gmra.mrb[0].mxu0 %v573
    %v656 = vpop.f32.mrb[0].mxu0
    %v657 = vadd.f32 %v560, %v656
    %v658 = vpop.f32.mrb[0].mxu0
    %659 = vdwg.mxu0
    %v660 = vand.u32 2147483647, %v642
    %vm661 = vcmp.le.f32.partialorder %v660, 0.7853982
    %vm662 = vcmp.lt.s32.totalorder %v642, 0
    %v663 = vand.u32 %v642, 2139095040
    %v664 = vshrl.u32 %v663, 23
    %v665 = vsub.s32 %v664, 127
    %v666 = vand.u32 2147483647, %v642
    %v667 = vand.u32 %v666, 8388607
    %v668 = vor.u32 %v667, 8388608
    %v669 = vsub.s32 0, %v668
    %v670 = vadd.s32 %v665, 1
    %vm671 = vcmp.gt.s32.totalorder %v670, 0
    %v672 = vsel %vm671, %v670, 0
    %v673 = vshrl.u32 %v672, 5
    %v674 = vand.u32 %v672, 31
    %v675 = vsub.s32 32, %v674
    %v676 = vshrl.u32 683565275, %v675
    %v677 = vshll.u32 683565275, %v674
    %v678 = vshrl.u32 2475754826, %v675
    %v679 = vor.u32 %v677, %v678
    %v680 = vshll.u32 2475754826, %v674
    %v681 = vshrl.u32 2131351028, %v675
    %v682 = vor.u32 %v680, %v681
    %v683 = vshll.u32 2131351028, %v674
    %v684 = vshrl.u32 2102212464, %v675
    %v685 = vor.u32 %v683, %v684
    %v686 = vshll.u32 2102212464, %v674
    %v687 = vshrl.u32 920167782, %v675
    %v688 = vor.u32 %v686, %v687
    %v689 = vshll.u32 920167782, %v674
    %v690 = vshrl.u32 1326507024, %v675
    %v691 = vor.u32 %v689, %v690
    %vm692 = vcmp.lt.s32.totalorder %v673, 1
    %vm693 = vcmp.lt.s32.totalorder %v673, 2
    %vm694 = vcmp.lt.s32.totalorder %v673, 3
    %vm695 = vcmp.lt.s32.totalorder %v673, 4
    %v696 = vsel %vm692, %v676, %v679
    %v697 = vsel %vm695, %v685, 2102212464
    %v698 = vsel %vm694, %v682, %v697
    %v699 = vsel %vm693, %v696, %v698
    %v700 = vsel %vm692, %v679, %v682
    %v701 = vsel %vm695, %v688, 920167782
    %v702 = vsel %vm694, %v685, %v701
    %v703 = vsel %vm693, %v700, %v702
    %v704 = vsel %vm692, %v682, %v685
    %v705 = vsel %vm695, %v691, 1326507024
    %v706 = vsel %vm694, %v688, %v705
    %v707 = vsel %vm693, %v704, %v706
    %v708 = vshll.u32 %v668, 8
    %v709 = vmul.u32.u64.compose %v708, %v707
    %v710 = vextract.low.u32 %v709
    %v711 = vextract.high.u32 %v709
    %v712 = vmul.u32.u64.compose %v708, %v703
    %v713 = vextract.low.u32 %v712
    %v714 = vextract.high.u32 %v712
    %v715 = vmul.u32 %v708, %v699
    %v716 = vadd.s32 %v711, %v713
    %vm717 = vc.u32 %v711, %v713
    %v718 = vadd.s32 %v714, 1
    %v719 = vsel %vm717, %v718, %v714
    %v720 = vadd.s32 %v715, %v719
    %v721 = vadd.s32 %v720, 536870912
    %v722 = vshrl.u32 %v721, 30
    %v723 = vshll.u32 %v722, 30
    %v724 = vsub.s32 %v720, %v723
    %vm725 = vcmp.lt.s32.totalorder %v724, 0
    %v726 = vsub.s32 0, %v724
    %v727 = vsel %vm725, %v726, %v724
    %v728 = vclz %v727
    %v729 = vsub.s32 %v728, 2
    %vm730 = vcmp.gt.s32.totalorder 0, %v729
    %v731 = vsel %vm730, 0, %v729
    %v732 = vsub.s32 32, %v731
    %v733 = vshll.u32 %v724, %v731
    %v734 = vshrl.u32 %v716, %v732
    %v735 = vor.u32 %v733, %v734
    %v736 = vsub.s32 4294967266, %v731
    %v737 = vadd.s32 %v736, 127
    %v738 = vshll.u32 %v737, 23
    %v739 = vor.u32 4788187, %v738
    %v740 = vand.u32 2147483647, %v739
    %v742 = vcvt.s32.f32 %v735
    %v743 = vmul.f32 %v742, %v740
    %v744 = vxor.u32 %v743, 2147483648
    %v745 = vsel %vm662, %v744, %v743
    %v746 = vsub.s32 4, %v722
    %v747 = vsel %vm662, %v746, %v722
    %v748 = vsel %vm661, %v642, %v745
    %v749 = vsel %vm661, 0, %v747
    %v750 = vcosq.f32.pop %v748
    %v751 = vsinq.f32.pop %v748
    %vm752 = vweird.f32 %v642
    %v753 = vadd.s32 %v749, 3
    %v754 = vand.u32 %v753, 3
    %vm755 = vcmp.lt.s32.totalorder %v754, 2
    %vm756 = vcmp.eq.s32.totalorder %v754, 0
    %v757 = vxor.u32 %v751, 2147483648
    %v758 = vsel %vm756, %v750, %v757
    %vm759 = vcmp.eq.s32.totalorder %v754, 2
    %v760 = vxor.u32 %v750, 2147483648
    %v761 = vsel %vm759, %v760, %v751
    %v762 = vsel %vm755, %v758, %v761
    %v763 = vsel %vm752, nan, %v762
    %v764 = vand.u32 2147483647, %v647
    %vm765 = vcmp.le.f32.partialorder %v764, 0.7853982
    %vm766 = vcmp.lt.s32.totalorder %v647, 0
    %v767 = vand.u32 %v647, 2139095040
    %v768 = vshrl.u32 %v767, 23
    %v769 = vsub.s32 %v768, 127
    %v770 = vand.u32 2147483647, %v647
    %v771 = vand.u32 %v770, 8388607
    %v772 = vor.u32 %v771, 8388608
    %v773 = vsub.s32 0, %v772
    %v774 = vadd.s32 %v769, 1
    %vm775 = vcmp.gt.s32.totalorder %v774, 0
    %v776 = vsel %vm775, %v774, 0
    %v777 = vshrl.u32 %v776, 5
    %v778 = vand.u32 %v776, 31
    %v779 = vsub.s32 32, %v778
    %v780 = vshrl.u32 683565275, %v779
    %v781 = vshll.u32 683565275, %v778
    %v782 = vshrl.u32 2475754826, %v779
    %v783 = vor.u32 %v781, %v782
    %v784 = vshll.u32 2475754826, %v778
    %v785 = vshrl.u32 2131351028, %v779
    %v786 = vor.u32 %v784, %v785
    %v787 = vshll.u32 2131351028, %v778
    %v788 = vshrl.u32 2102212464, %v779
    %v789 = vor.u32 %v787, %v788
    %v790 = vshll.u32 2102212464, %v778
    %v791 = vshrl.u32 920167782, %v779
    %v792 = vor.u32 %v790, %v791
    %v793 = vshll.u32 920167782, %v778
    %v794 = vshrl.u32 1326507024, %v779
    %v795 = vor.u32 %v793, %v794
    %vm796 = vcmp.lt.s32.totalorder %v777, 1
    %vm797 = vcmp.lt.s32.totalorder %v777, 2
    %vm798 = vcmp.lt.s32.totalorder %v777, 3
    %vm799 = vcmp.lt.s32.totalorder %v777, 4
    %v800 = vsel %vm796, %v780, %v783
    %v801 = vsel %vm799, %v789, 2102212464
    %v802 = vsel %vm798, %v786, %v801
    %v803 = vsel %vm797, %v800, %v802
    %v804 = vsel %vm796, %v783, %v786
    %v805 = vsel %vm799, %v792, 920167782
    %v806 = vsel %vm798, %v789, %v805
    %v807 = vsel %vm797, %v804, %v806
    %v808 = vsel %vm796, %v786, %v789
    %v809 = vsel %vm799, %v795, 1326507024
    %v810 = vsel %vm798, %v792, %v809
    %v811 = vsel %vm797, %v808, %v810
    %v812 = vshll.u32 %v772, 8
    %v813 = vmul.u32.u64.compose %v812, %v811
    %v814 = vextract.low.u32 %v813
    %v815 = vextract.high.u32 %v813
    %v816 = vmul.u32.u64.compose %v812, %v807
    %v817 = vextract.low.u32 %v816
    %v818 = vextract.high.u32 %v816
    %v819 = vmul.u32 %v812, %v803
    %v820 = vadd.s32 %v815, %v817
    %vm821 = vc.u32 %v815, %v817
    %v822 = vadd.s32 %v818, 1
    %v823 = vsel %vm821, %v822, %v818
    %v824 = vadd.s32 %v819, %v823
    %v825 = vadd.s32 %v824, 536870912
    %v826 = vshrl.u32 %v825, 30
    %v827 = vshll.u32 %v826, 30
    %v828 = vsub.s32 %v824, %v827
    %vm829 = vcmp.lt.s32.totalorder %v828, 0
    %v830 = vsub.s32 0, %v828
    %v831 = vsel %vm829, %v830, %v828
    %v832 = vclz %v831
    %v833 = vsub.s32 %v832, 2
    %vm834 = vcmp.gt.s32.totalorder 0, %v833
    %v835 = vsel %vm834, 0, %v833
    %v836 = vsub.s32 32, %v835
    %v837 = vshll.u32 %v828, %v835
    %v838 = vshrl.u32 %v820, %v836
    %v839 = vor.u32 %v837, %v838
    %v840 = vsub.s32 4294967266, %v835
    %v841 = vadd.s32 %v840, 127
    %v842 = vshll.u32 %v841, 23
    %v843 = vor.u32 4788187, %v842
    %v844 = vand.u32 2147483647, %v843
    %v846 = vcvt.s32.f32 %v839
    %v847 = vmul.f32 %v846, %v844
    %v848 = vxor.u32 %v847, 2147483648
    %v849 = vsel %vm766, %v848, %v847
    %v850 = vsub.s32 4, %v826
    %v851 = vsel %vm766, %v850, %v826
    %v852 = vsel %vm765, %v647, %v849
    %v853 = vsel %vm765, 0, %v851
    %v854 = vcosq.f32.pop %v852
    %v855 = vsinq.f32.pop %v852
    %vm856 = vweird.f32 %v647
    %v857 = vadd.s32 %v853, 3
    %v858 = vand.u32 %v857, 3
    %vm859 = vcmp.lt.s32.totalorder %v858, 2
    %vm860 = vcmp.eq.s32.totalorder %v858, 0
    %v861 = vxor.u32 %v855, 2147483648
    %v862 = vsel %vm860, %v854, %v861
    %vm863 = vcmp.eq.s32.totalorder %v858, 2
    %v864 = vxor.u32 %v854, 2147483648
    %v865 = vsel %vm863, %v864, %v855
    %v866 = vsel %vm859, %v862, %v865
    %v867 = vsel %vm856, nan, %v866
    %v868 = vand.u32 2147483647, %v652
    %vm869 = vcmp.le.f32.partialorder %v868, 0.7853982
    %vm870 = vcmp.lt.s32.totalorder %v652, 0
    %v871 = vand.u32 %v652, 2139095040
    %v872 = vshrl.u32 %v871, 23
    %v873 = vsub.s32 %v872, 127
    %v874 = vand.u32 2147483647, %v652
    %v875 = vand.u32 %v874, 8388607
    %v876 = vor.u32 %v875, 8388608
    %v877 = vsub.s32 0, %v876
    %v878 = vadd.s32 %v873, 1
    %vm879 = vcmp.gt.s32.totalorder %v878, 0
    %v880 = vsel %vm879, %v878, 0
    %v881 = vshrl.u32 %v880, 5
    %v882 = vand.u32 %v880, 31
    %v883 = vsub.s32 32, %v882
    %v884 = vshrl.u32 683565275, %v883
    %v885 = vshll.u32 683565275, %v882
    %v886 = vshrl.u32 2475754826, %v883
    %v887 = vor.u32 %v885, %v886
    %v888 = vshll.u32 2475754826, %v882
    %v889 = vshrl.u32 2131351028, %v883
    %v890 = vor.u32 %v888, %v889
    %v891 = vshll.u32 2131351028, %v882
    %v892 = vshrl.u32 2102212464, %v883
    %v893 = vor.u32 %v891, %v892
    %v894 = vshll.u32 2102212464, %v882
    %v895 = vshrl.u32 920167782, %v883
    %v896 = vor.u32 %v894, %v895
    %v897 = vshll.u32 920167782, %v882
    %v898 = vshrl.u32 1326507024, %v883
    %v899 = vor.u32 %v897, %v898
    %vm900 = vcmp.lt.s32.totalorder %v881, 1
    %vm901 = vcmp.lt.s32.totalorder %v881, 2
    %vm902 = vcmp.lt.s32.totalorder %v881, 3
    %vm903 = vcmp.lt.s32.totalorder %v881, 4
    %v904 = vsel %vm900, %v884, %v887
    %v905 = vsel %vm903, %v893, 2102212464
    %v906 = vsel %vm902, %v890, %v905
    %v907 = vsel %vm901, %v904, %v906
    %v908 = vsel %vm900, %v887, %v890
    %v909 = vsel %vm903, %v896, 920167782
    %v910 = vsel %vm902, %v893, %v909
    %v911 = vsel %vm901, %v908, %v910
    %v912 = vsel %vm900, %v890, %v893
    %v913 = vsel %vm903, %v899, 1326507024
    %v914 = vsel %vm902, %v896, %v913
    %v915 = vsel %vm901, %v912, %v914
    %v916 = vshll.u32 %v876, 8
    %v917 = vmul.u32.u64.compose %v916, %v915
    %v918 = vextract.low.u32 %v917
    %v919 = vextract.high.u32 %v917
    %v920 = vmul.u32.u64.compose %v916, %v911
    %v921 = vextract.low.u32 %v920
    %v922 = vextract.high.u32 %v920
    %v923 = vmul.u32 %v916, %v907
    %v924 = vadd.s32 %v919, %v921
    %vm925 = vc.u32 %v919, %v921
    %v926 = vadd.s32 %v922, 1
    %v927 = vsel %vm925, %v926, %v922
    %v928 = vadd.s32 %v923, %v927
    %v929 = vadd.s32 %v928, 536870912
    %v930 = vshrl.u32 %v929, 30
    %v931 = vshll.u32 %v930, 30
    %v932 = vsub.s32 %v928, %v931
    %vm933 = vcmp.lt.s32.totalorder %v932, 0
    %v934 = vsub.s32 0, %v932
    %v935 = vsel %vm933, %v934, %v932
    %v936 = vclz %v935
    %v937 = vsub.s32 %v936, 2
    %vm938 = vcmp.gt.s32.totalorder 0, %v937
    %v939 = vsel %vm938, 0, %v937
    %v940 = vsub.s32 32, %v939
    %v941 = vshll.u32 %v932, %v939
    %v942 = vshrl.u32 %v924, %v940
    %v943 = vor.u32 %v941, %v942
    %v944 = vsub.s32 4294967266, %v939
    %v945 = vadd.s32 %v944, 127
    %v946 = vshll.u32 %v945, 23
    %v947 = vor.u32 4788187, %v946
    %v948 = vand.u32 2147483647, %v947
    %v950 = vcvt.s32.f32 %v943
    %v951 = vmul.f32 %v950, %v948
    %v952 = vxor.u32 %v951, 2147483648
    %v953 = vsel %vm870, %v952, %v951
    %v954 = vsub.s32 4, %v930
    %v955 = vsel %vm870, %v954, %v930
    %v956 = vsel %vm869, %v652, %v953
    %v957 = vsel %vm869, 0, %v955
    %v958 = vcosq.f32.pop %v956
    %v959 = vsinq.f32.pop %v956
    %vm960 = vweird.f32 %v652
    %v961 = vadd.s32 %v957, 3
    %v962 = vand.u32 %v961, 3
    %vm963 = vcmp.lt.s32.totalorder %v962, 2
    %vm964 = vcmp.eq.s32.totalorder %v962, 0
    %v965 = vxor.u32 %v959, 2147483648
    %v966 = vsel %vm964, %v958, %v965
    %vm967 = vcmp.eq.s32.totalorder %v962, 2
    %v968 = vxor.u32 %v958, 2147483648
    %v969 = vsel %vm967, %v968, %v959
    %v970 = vsel %vm963, %v966, %v969
    %v971 = vsel %vm960, nan, %v970
    %v972 = vand.u32 2147483647, %v657
    %vm973 = vcmp.le.f32.partialorder %v972, 0.7853982
    %vm974 = vcmp.lt.s32.totalorder %v657, 0
    %v975 = vand.u32 %v657, 2139095040
    %v976 = vshrl.u32 %v975, 23
    %v977 = vsub.s32 %v976, 127
    %v978 = vand.u32 2147483647, %v657
    %v979 = vand.u32 %v978, 8388607
    %v980 = vor.u32 %v979, 8388608
    %v981 = vsub.s32 0, %v980
    %v982 = vadd.s32 %v977, 1
    %vm983 = vcmp.gt.s32.totalorder %v982, 0
    %v984 = vsel %vm983, %v982, 0
    %v985 = vshrl.u32 %v984, 5
    %v986 = vand.u32 %v984, 31
    %v987 = vsub.s32 32, %v986
    %v988 = vshrl.u32 683565275, %v987
    %v989 = vshll.u32 683565275, %v986
    %v990 = vshrl.u32 2475754826, %v987
    %v991 = vor.u32 %v989, %v990
    %v992 = vshll.u32 2475754826, %v986
    %v993 = vshrl.u32 2131351028, %v987
    %v994 = vor.u32 %v992, %v993
    %v995 = vshll.u32 2131351028, %v986
    %v996 = vshrl.u32 2102212464, %v987
    %v997 = vor.u32 %v995, %v996
    %v998 = vshll.u32 2102212464, %v986
    %v999 = vshrl.u32 920167782, %v987
    %v1000 = vor.u32 %v998, %v999
    %v1001 = vshll.u32 920167782, %v986
    %v1002 = vshrl.u32 1326507024, %v987
    %v1003 = vor.u32 %v1001, %v1002
    %vm1004 = vcmp.lt.s32.totalorder %v985, 1
    %vm1005 = vcmp.lt.s32.totalorder %v985, 2
    %vm1006 = vcmp.lt.s32.totalorder %v985, 3
    %vm1007 = vcmp.lt.s32.totalorder %v985, 4
    %v1008 = vsel %vm1004, %v988, %v991
    %v1009 = vsel %vm1007, %v997, 2102212464
    %v1010 = vsel %vm1006, %v994, %v1009
    %v1011 = vsel %vm1005, %v1008, %v1010
    %v1012 = vsel %vm1004, %v991, %v994
    %v1013 = vsel %vm1007, %v1000, 920167782
    %v1014 = vsel %vm1006, %v997, %v1013
    %v1015 = vsel %vm1005, %v1012, %v1014
    %v1016 = vsel %vm1004, %v994, %v997
    %v1017 = vsel %vm1007, %v1003, 1326507024
    %v1018 = vsel %vm1006, %v1000, %v1017
    %v1019 = vsel %vm1005, %v1016, %v1018
    %v1020 = vshll.u32 %v980, 8
    %v1021 = vmul.u32.u64.compose %v1020, %v1019
    %v1022 = vextract.low.u32 %v1021
    %v1023 = vextract.high.u32 %v1021
    %v1024 = vmul.u32.u64.compose %v1020, %v1015
    %v1025 = vextract.low.u32 %v1024
    %v1026 = vextract.high.u32 %v1024
    %v1027 = vmul.u32 %v1020, %v1011
    %v1028 = vadd.s32 %v1023, %v1025
    %vm1029 = vc.u32 %v1023, %v1025
    %v1030 = vadd.s32 %v1026, 1
    %v1031 = vsel %vm1029, %v1030, %v1026
    %v1032 = vadd.s32 %v1027, %v1031
    %v1033 = vadd.s32 %v1032, 536870912
    %v1034 = vshrl.u32 %v1033, 30
    %v1035 = vshll.u32 %v1034, 30
    %v1036 = vsub.s32 %v1032, %v1035
    %vm1037 = vcmp.lt.s32.totalorder %v1036, 0
    %v1038 = vsub.s32 0, %v1036
    %v1039 = vsel %vm1037, %v1038, %v1036
    %v1040 = vclz %v1039
    %v1041 = vsub.s32 %v1040, 2
    %vm1042 = vcmp.gt.s32.totalorder 0, %v1041
    %v1043 = vsel %vm1042, 0, %v1041
    %v1044 = vsub.s32 32, %v1043
    %v1045 = vshll.u32 %v1036, %v1043
    %v1046 = vshrl.u32 %v1028, %v1044
    %v1047 = vor.u32 %v1045, %v1046
    %v1048 = vsub.s32 4294967266, %v1043
    %v1049 = vadd.s32 %v1048, 127
    %v1050 = vshll.u32 %v1049, 23
    %v1051 = vor.u32 4788187, %v1050
    %v1052 = vand.u32 2147483647, %v1051
    %v1054 = vcvt.s32.f32 %v1047
    %v1055 = vmul.f32 %v1054, %v1052
    %v1056 = vxor.u32 %v1055, 2147483648
    %v1057 = vsel %vm974, %v1056, %v1055
    %v1058 = vsub.s32 4, %v1034
    %v1059 = vsel %vm974, %v1058, %v1034
    %v1060 = vsel %vm973, %v657, %v1057
    %v1061 = vsel %vm973, 0, %v1059
    %v1062 = vcosq.f32.pop %v1060
    %v1063 = vsinq.f32.pop %v1060
    %vm1064 = vweird.f32 %v657
    %v1065 = vadd.s32 %v1061, 3
    %v1066 = vand.u32 %v1065, 3
    %vm1067 = vcmp.lt.s32.totalorder %v1066, 2
    %vm1068 = vcmp.eq.s32.totalorder %v1066, 0
    %v1069 = vxor.u32 %v1063, 2147483648
    %v1070 = vsel %vm1068, %v1062, %v1069
    %vm1071 = vcmp.eq.s32.totalorder %v1066, 2
    %v1072 = vxor.u32 %v1062, 2147483648
    %v1073 = vsel %vm1071, %v1072, %v1063
    %v1074 = vsel %vm1067, %v1070, %v1073
    %v1075 = vsel %vm1064, nan, %v1074
    %s1076 = scalar_lea.vmem %s3, 32
    %v1077 = vld [vmem:[%s1076] sm:$0xff]
    %v1078 = vld [vmem:[%s1076 + $0x8] sm:$0xff]
    %v1079 = vld [vmem:[%s1076 + $0x10] sm:$0xff]
    %v1080 = vld [vmem:[%s1076 + $0x18] sm:$0xff]
    %s1081 = scalar_lea.vmem %s4, 32
    %v1082 = vld [vmem:[%s1081] sm:$0xff]
    %v1083 = vld [vmem:[%s1081 + $0x8] sm:$0xff]
    %v1084 = vld [vmem:[%s1081 + $0x10] sm:$0xff]
    %v1085 = vld [vmem:[%s1081 + $0x18] sm:$0xff]
    %1087 = vset.pattern.permute.xlu0 0
    %1088 = vperm.xlu0 %1087, %v1082
    %v1089 = vpop.permute.xlu0 %1088
    %1092 = vset.pattern.permute.xlu0 0
    %1093 = vperm.xlu0 %1092, %v1083
    %v1094 = vpop.permute.xlu0 %1093
    %1097 = vset.pattern.permute.xlu0 0
    %1098 = vperm.xlu0 %1097, %v1084
    %v1099 = vpop.permute.xlu0 %1098
    %1102 = vset.pattern.permute.xlu0 0
    %1103 = vperm.xlu0 %1102, %v1085
    %v1104 = vpop.permute.xlu0 %1103
    %v1107 = vsel %vm562, %v1077, 0
    %v1110 = vsel %vm562, %v1078, 0
    %v1113 = vsel %vm562, %v1079, 0
    %v1116 = vsel %vm562, %v1080, 0
    %1118 = vmatprep.subr.mxu0 0.0
    %1119 = vmatpush1.msra.mxu0 %v763
    %1120 = vmatprep.subr.mxu0 0.0
    %1121 = vmatpush1.msra.mxu0 %v867
    %1122 = vmatprep.subr.mxu0 0.0
    %1123 = vmatpush1.msra.mxu0 %v971
    %1124 = vmatprep.subr.mxu0 0.0
    %1125 = vmatpush1.msra.mxu0 %v1075
    %1126 = vmatprep.subr.mxu0 0.0
    %1127 = vmatpush1.msra.mxu0 0.0
    %1128 = vmatprep.subr.mxu0 0.0
    %1129 = vmatpush1.msra.mxu0 0.0
    %1130 = vmatprep.subr.mxu0 0.0
    %1131 = vmatpush1.msra.mxu0 0.0
    %1132 = vmatprep.subr.mxu0 0.0
    %1133 = vmatpush1.msra.mxu0 0.0
    %1134 = vmatprep.subr.mxu0 0.0
    %1135 = vmatpush1.msra.mxu0 0.0
    %1136 = vmatprep.subr.mxu0 0.0
    %1137 = vmatpush1.msra.mxu0 0.0
    %1138 = vmatprep.subr.mxu0 0.0
    %1139 = vmatpush1.msra.mxu0 0.0
    %1140 = vmatprep.subr.mxu0 0.0
    %1141 = vmatpush1.msra.mxu0 0.0
    %1142 = vmatprep.subr.mxu0 0.0
    %1143 = vmatpush1.msra.mxu0 0.0
    %1144 = vmatprep.subr.mxu0 0.0
    %1145 = vmatpush1.msra.mxu0 0.0
    %1146 = vmatprep.subr.mxu0 0.0
    %1147 = vmatpush1.msra.mxu0 0.0
    %1148 = vmatprep.subr.mxu0 0.0
    %1149 = vmatpush1.msra.mxu0 0.0
    %1150 = vmatprep.subr.mxu0 0.0
    %1151 = vmatpush1.msra.mxu0 0.0
    %1152 = vmatprep.subr.mxu0 0.0
    %1153 = vmatpush1.msra.mxu0 0.0
    %1154 = vmatprep.subr.mxu0 0.0
    %1155 = vmatpush1.msra.mxu0 0.0
    %1156 = vmatprep.subr.mxu0 0.0
    %1157 = vmatpush1.msra.mxu0 0.0
    %1158 = vmatprep.subr.mxu0 0.0
    %1159 = vmatpush1.msra.mxu0 0.0
    %1160 = vmatprep.subr.mxu0 0.0
    %1161 = vmatpush1.msra.mxu0 0.0
    %1162 = vmatprep.subr.mxu0 0.0
    %1163 = vmatpush1.msra.mxu0 0.0
    %1164 = vmatprep.subr.mxu0 0.0
    %1165 = vmatpush1.msra.mxu0 0.0
    %1166 = vmatprep.subr.mxu0 0.0
    %1167 = vmatpush1.msra.mxu0 0.0
    %1168 = vmatprep.subr.mxu0 0.0
    %1169 = vmatpush1.msra.mxu0 0.0
    %1170 = vmatprep.subr.mxu0 0.0
    %1171 = vmatpush1.msra.mxu0 0.0
    %1172 = vmatprep.subr.mxu0 0.0
    %1173 = vmatpush1.msra.mxu0 0.0
    %1174 = vmatprep.subr.mxu0 0.0
    %1175 = vmatpush1.msra.mxu0 0.0
    %1176 = vmatprep.subr.mxu0 0.0
    %1177 = vmatpush1.msra.mxu0 0.0
    %1178 = vmatprep.subr.mxu0 0.0
    %1179 = vmatpush1.msra.mxu0 0.0
    %1180 = vmatprep.subr.mxu0 0.0
    %1181 = vmatpush1.msra.mxu0 0.0
    %1182 = vmatprep.mubr.f32.mxu0 0.0
    %1183 = vmatmul.mubr.f32.gmra.mrb[0].mxu0 %v1107
    %v1184 = vpop.f32.mrb[0].mxu0
    %v1185 = vadd.f32 %v1089, %v1184
    %v1186 = vpop.f32.mrb[0].mxu0
    %1187 = vmatprep.mubr.f32.mxu0 0.0
    %1188 = vmatmul.mubr.f32.gmra.mrb[0].mxu0 %v1110
    %v1189 = vpop.f32.mrb[0].mxu0
    %v1190 = vadd.f32 %v1094, %v1189
    %v1191 = vpop.f32.mrb[0].mxu0
    %1192 = vmatprep.mubr.f32.mxu0 0.0
    %1193 = vmatmul.mubr.f32.gmra.mrb[0].mxu0 %v1113
    %v1194 = vpop.f32.mrb[0].mxu0
    %v1195 = vadd.f32 %v1099, %v1194
    %v1196 = vpop.f32.mrb[0].mxu0
    %1197 = vmatprep.mubr.f32.mxu0 0.0
    %1198 = vmatmul.mubr.f32.gmra.mrb[0].mxu0 %v1116
    %v1199 = vpop.f32.mrb[0].mxu0
    %v1200 = vadd.f32 %v1104, %v1199
    %v1201 = vpop.f32.mrb[0].mxu0
    %1202 = vdwg.mxu0
    %v1203 = vand.u32 2147483647, %v1185
    %vm1204 = vcmp.le.f32.partialorder %v1203, 0.7853982
    %vm1205 = vcmp.lt.s32.totalorder %v1185, 0
    %v1206 = vand.u32 %v1185, 2139095040
    %v1207 = vshrl.u32 %v1206, 23
    %v1208 = vsub.s32 %v1207, 127
    %v1209 = vand.u32 2147483647, %v1185
    %v1210 = vand.u32 %v1209, 8388607
    %v1211 = vor.u32 %v1210, 8388608
    %v1212 = vsub.s32 0, %v1211
    %v1213 = vadd.s32 %v1208, 1
    %vm1214 = vcmp.gt.s32.totalorder %v1213, 0
    %v1215 = vsel %vm1214, %v1213, 0
    %v1216 = vshrl.u32 %v1215, 5
    %v1217 = vand.u32 %v1215, 31
    %v1218 = vsub.s32 32, %v1217
    %v1219 = vshrl.u32 683565275, %v1218
    %v1220 = vshll.u32 683565275, %v1217
    %v1221 = vshrl.u32 2475754826, %v1218
    %v1222 = vor.u32 %v1220, %v1221
    %v1223 = vshll.u32 2475754826, %v1217
    %v1224 = vshrl.u32 2131351028, %v1218
    %v1225 = vor.u32 %v1223, %v1224
    %v1226 = vshll.u32 2131351028, %v1217
    %v1227 = vshrl.u32 2102212464, %v1218
    %v1228 = vor.u32 %v1226, %v1227
    %v1229 = vshll.u32 2102212464, %v1217
    %v1230 = vshrl.u32 920167782, %v1218
    %v1231 = vor.u32 %v1229, %v1230
    %v1232 = vshll.u32 920167782, %v1217
    %v1233 = vshrl.u32 1326507024, %v1218
    %v1234 = vor.u32 %v1232, %v1233
    %vm1235 = vcmp.lt.s32.totalorder %v1216, 1
    %vm1236 = vcmp.lt.s32.totalorder %v1216, 2
    %vm1237 = vcmp.lt.s32.totalorder %v1216, 3
    %vm1238 = vcmp.lt.s32.totalorder %v1216, 4
    %v1239 = vsel %vm1235, %v1219, %v1222
    %v1240 = vsel %vm1238, %v1228, 2102212464
    %v1241 = vsel %vm1237, %v1225, %v1240
    %v1242 = vsel %vm1236, %v1239, %v1241
    %v1243 = vsel %vm1235, %v1222, %v1225
    %v1244 = vsel %vm1238, %v1231, 920167782
    %v1245 = vsel %vm1237, %v1228, %v1244
    %v1246 = vsel %vm1236, %v1243, %v1245
    %v1247 = vsel %vm1235, %v1225, %v1228
    %v1248 = vsel %vm1238, %v1234, 1326507024
    %v1249 = vsel %vm1237, %v1231, %v1248
    %v1250 = vsel %vm1236, %v1247, %v1249
    %v1251 = vshll.u32 %v1211, 8
    %v1252 = vmul.u32.u64.compose %v1251, %v1250
    %v1253 = vextract.low.u32 %v1252
    %v1254 = vextract.high.u32 %v1252
    %v1255 = vmul.u32.u64.compose %v1251, %v1246
    %v1256 = vextract.low.u32 %v1255
    %v1257 = vextract.high.u32 %v1255
    %v1258 = vmul.u32 %v1251, %v1242
    %v1259 = vadd.s32 %v1254, %v1256
    %vm1260 = vc.u32 %v1254, %v1256
    %v1261 = vadd.s32 %v1257, 1
    %v1262 = vsel %vm1260, %v1261, %v1257
    %v1263 = vadd.s32 %v1258, %v1262
    %v1264 = vadd.s32 %v1263, 536870912
    %v1265 = vshrl.u32 %v1264, 30
    %v1266 = vshll.u32 %v1265, 30
    %v1267 = vsub.s32 %v1263, %v1266
    %vm1268 = vcmp.lt.s32.totalorder %v1267, 0
    %v1269 = vsub.s32 0, %v1267
    %v1270 = vsel %vm1268, %v1269, %v1267
    %v1271 = vclz %v1270
    %v1272 = vsub.s32 %v1271, 2
    %vm1273 = vcmp.gt.s32.totalorder 0, %v1272
    %v1274 = vsel %vm1273, 0, %v1272
    %v1275 = vsub.s32 32, %v1274
    %v1276 = vshll.u32 %v1267, %v1274
    %v1277 = vshrl.u32 %v1259, %v1275
    %v1278 = vor.u32 %v1276, %v1277
    %v1279 = vsub.s32 4294967266, %v1274
    %v1280 = vadd.s32 %v1279, 127
    %v1281 = vshll.u32 %v1280, 23
    %v1282 = vor.u32 4788187, %v1281
    %v1283 = vand.u32 2147483647, %v1282
    %v1285 = vcvt.s32.f32 %v1278
    %v1286 = vmul.f32 %v1285, %v1283
    %v1287 = vxor.u32 %v1286, 2147483648
    %v1288 = vsel %vm1205, %v1287, %v1286
    %v1289 = vsub.s32 4, %v1265
    %v1290 = vsel %vm1205, %v1289, %v1265
    %v1291 = vsel %vm1204, %v1185, %v1288
    %v1292 = vsel %vm1204, 0, %v1290
    %v1293 = vcosq.f32.pop %v1291
    %v1294 = vsinq.f32.pop %v1291
    %vm1295 = vweird.f32 %v1185
    %v1296 = vadd.s32 %v1292, 3
    %v1297 = vand.u32 %v1296, 3
    %vm1298 = vcmp.lt.s32.totalorder %v1297, 2
    %vm1299 = vcmp.eq.s32.totalorder %v1297, 0
    %v1300 = vxor.u32 %v1294, 2147483648
    %v1301 = vsel %vm1299, %v1293, %v1300
    %vm1302 = vcmp.eq.s32.totalorder %v1297, 2
    %v1303 = vxor.u32 %v1293, 2147483648
    %v1304 = vsel %vm1302, %v1303, %v1294
    %v1305 = vsel %vm1298, %v1301, %v1304
    %v1306 = vsel %vm1295, nan, %v1305
    %v1307 = vand.u32 2147483647, %v1190
    %vm1308 = vcmp.le.f32.partialorder %v1307, 0.7853982
    %vm1309 = vcmp.lt.s32.totalorder %v1190, 0
    %v1310 = vand.u32 %v1190, 2139095040
    %v1311 = vshrl.u32 %v1310, 23
    %v1312 = vsub.s32 %v1311, 127
    %v1313 = vand.u32 2147483647, %v1190
    %v1314 = vand.u32 %v1313, 8388607
    %v1315 = vor.u32 %v1314, 8388608
    %v1316 = vsub.s32 0, %v1315
    %v1317 = vadd.s32 %v1312, 1
    %vm1318 = vcmp.gt.s32.totalorder %v1317, 0
    %v1319 = vsel %vm1318, %v1317, 0
    %v1320 = vshrl.u32 %v1319, 5
    %v1321 = vand.u32 %v1319, 31
    %v1322 = vsub.s32 32, %v1321
    %v1323 = vshrl.u32 683565275, %v1322
    %v1324 = vshll.u32 683565275, %v1321
    %v1325 = vshrl.u32 2475754826, %v1322
    %v1326 = vor.u32 %v1324, %v1325
    %v1327 = vshll.u32 2475754826, %v1321
    %v1328 = vshrl.u32 2131351028, %v1322
    %v1329 = vor.u32 %v1327, %v1328
    %v1330 = vshll.u32 2131351028, %v1321
    %v1331 = vshrl.u32 2102212464, %v1322
    %v1332 = vor.u32 %v1330, %v1331
    %v1333 = vshll.u32 2102212464, %v1321
    %v1334 = vshrl.u32 920167782, %v1322
    %v1335 = vor.u32 %v1333, %v1334
    %v1336 = vshll.u32 920167782, %v1321
    %v1337 = vshrl.u32 1326507024, %v1322
    %v1338 = vor.u32 %v1336, %v1337
    %vm1339 = vcmp.lt.s32.totalorder %v1320, 1
    %vm1340 = vcmp.lt.s32.totalorder %v1320, 2
    %vm1341 = vcmp.lt.s32.totalorder %v1320, 3
    %vm1342 = vcmp.lt.s32.totalorder %v1320, 4
    %v1343 = vsel %vm1339, %v1323, %v1326
    %v1344 = vsel %vm1342, %v1332, 2102212464
    %v1345 = vsel %vm1341, %v1329, %v1344
    %v1346 = vsel %vm1340, %v1343, %v1345
    %v1347 = vsel %vm1339, %v1326, %v1329
    %v1348 = vsel %vm1342, %v1335, 920167782
    %v1349 = vsel %vm1341, %v1332, %v1348
    %v1350 = vsel %vm1340, %v1347, %v1349
    %v1351 = vsel %vm1339, %v1329, %v1332
    %v1352 = vsel %vm1342, %v1338, 1326507024
    %v1353 = vsel %vm1341, %v1335, %v1352
    %v1354 = vsel %vm1340, %v1351, %v1353
    %v1355 = vshll.u32 %v1315, 8
    %v1356 = vmul.u32.u64.compose %v1355, %v1354
    %v1357 = vextract.low.u32 %v1356
    %v1358 = vextract.high.u32 %v1356
    %v1359 = vmul.u32.u64.compose %v1355, %v1350
    %v1360 = vextract.low.u32 %v1359
    %v1361 = vextract.high.u32 %v1359
    %v1362 = vmul.u32 %v1355, %v1346
    %v1363 = vadd.s32 %v1358, %v1360
    %vm1364 = vc.u32 %v1358, %v1360
    %v1365 = vadd.s32 %v1361, 1
    %v1366 = vsel %vm1364, %v1365, %v1361
    %v1367 = vadd.s32 %v1362, %v1366
    %v1368 = vadd.s32 %v1367, 536870912
    %v1369 = vshrl.u32 %v1368, 30
    %v1370 = vshll.u32 %v1369, 30
    %v1371 = vsub.s32 %v1367, %v1370
    %vm1372 = vcmp.lt.s32.totalorder %v1371, 0
    %v1373 = vsub.s32 0, %v1371
    %v1374 = vsel %vm1372, %v1373, %v1371
    %v1375 = vclz %v1374
    %v1376 = vsub.s32 %v1375, 2
    %vm1377 = vcmp.gt.s32.totalorder 0, %v1376
    %v1378 = vsel %vm1377, 0, %v1376
    %v1379 = vsub.s32 32, %v1378
    %v1380 = vshll.u32 %v1371, %v1378
    %v1381 = vshrl.u32 %v1363, %v1379
    %v1382 = vor.u32 %v1380, %v1381
    %v1383 = vsub.s32 4294967266, %v1378
    %v1384 = vadd.s32 %v1383, 127
    %v1385 = vshll.u32 %v1384, 23
    %v1386 = vor.u32 4788187, %v1385
    %v1387 = vand.u32 2147483647, %v1386
    %v1389 = vcvt.s32.f32 %v1382
    %v1390 = vmul.f32 %v1389, %v1387
    %v1391 = vxor.u32 %v1390, 2147483648
    %v1392 = vsel %vm1309, %v1391, %v1390
    %v1393 = vsub.s32 4, %v1369
    %v1394 = vsel %vm1309, %v1393, %v1369
    %v1395 = vsel %vm1308, %v1190, %v1392
    %v1396 = vsel %vm1308, 0, %v1394
    %v1397 = vcosq.f32.pop %v1395
    %v1398 = vsinq.f32.pop %v1395
    %vm1399 = vweird.f32 %v1190
    %v1400 = vadd.s32 %v1396, 3
    %v1401 = vand.u32 %v1400, 3
    %vm1402 = vcmp.lt.s32.totalorder %v1401, 2
    %vm1403 = vcmp.eq.s32.totalorder %v1401, 0
    %v1404 = vxor.u32 %v1398, 2147483648
    %v1405 = vsel %vm1403, %v1397, %v1404
    %vm1406 = vcmp.eq.s32.totalorder %v1401, 2
    %v1407 = vxor.u32 %v1397, 2147483648
    %v1408 = vsel %vm1406, %v1407, %v1398
    %v1409 = vsel %vm1402, %v1405, %v1408
    %v1410 = vsel %vm1399, nan, %v1409
    %v1411 = vand.u32 2147483647, %v1195
    %vm1412 = vcmp.le.f32.partialorder %v1411, 0.7853982
    %vm1413 = vcmp.lt.s32.totalorder %v1195, 0
    %v1414 = vand.u32 %v1195, 2139095040
    %v1415 = vshrl.u32 %v1414, 23
    %v1416 = vsub.s32 %v1415, 127
    %v1417 = vand.u32 2147483647, %v1195
    %v1418 = vand.u32 %v1417, 8388607
    %v1419 = vor.u32 %v1418, 8388608
    %v1420 = vsub.s32 0, %v1419
    %v1421 = vadd.s32 %v1416, 1
    %vm1422 = vcmp.gt.s32.totalorder %v1421, 0
    %v1423 = vsel %vm1422, %v1421, 0
    %v1424 = vshrl.u32 %v1423, 5
    %v1425 = vand.u32 %v1423, 31
    %v1426 = vsub.s32 32, %v1425
    %v1427 = vshrl.u32 683565275, %v1426
    %v1428 = vshll.u32 683565275, %v1425
    %v1429 = vshrl.u32 2475754826, %v1426
    %v1430 = vor.u32 %v1428, %v1429
    %v1431 = vshll.u32 2475754826, %v1425
    %v1432 = vshrl.u32 2131351028, %v1426
    %v1433 = vor.u32 %v1431, %v1432
    %v1434 = vshll.u32 2131351028, %v1425
    %v1435 = vshrl.u32 2102212464, %v1426
    %v1436 = vor.u32 %v1434, %v1435
    %v1437 = vshll.u32 2102212464, %v1425
    %v1438 = vshrl.u32 920167782, %v1426
    %v1439 = vor.u32 %v1437, %v1438
    %v1440 = vshll.u32 920167782, %v1425
    %v1441 = vshrl.u32 1326507024, %v1426
    %v1442 = vor.u32 %v1440, %v1441
    %vm1443 = vcmp.lt.s32.totalorder %v1424, 1
    %vm1444 = vcmp.lt.s32.totalorder %v1424, 2
    %vm1445 = vcmp.lt.s32.totalorder %v1424, 3
    %vm1446 = vcmp.lt.s32.totalorder %v1424, 4
    %v1447 = vsel %vm1443, %v1427, %v1430
    %v1448 = vsel %vm1446, %v1436, 2102212464
    %v1449 = vsel %vm1445, %v1433, %v1448
    %v1450 = vsel %vm1444, %v1447, %v1449
    %v1451 = vsel %vm1443, %v1430, %v1433
    %v1452 = vsel %vm1446, %v1439, 920167782
    %v1453 = vsel %vm1445, %v1436, %v1452
    %v1454 = vsel %vm1444, %v1451, %v1453
    %v1455 = vsel %vm1443, %v1433, %v1436
    %v1456 = vsel %vm1446, %v1442, 1326507024
    %v1457 = vsel %vm1445, %v1439, %v1456
    %v1458 = vsel %vm1444, %v1455, %v1457
    %v1459 = vshll.u32 %v1419, 8
    %v1460 = vmul.u32.u64.compose %v1459, %v1458
    %v1461 = vextract.low.u32 %v1460
    %v1462 = vextract.high.u32 %v1460
    %v1463 = vmul.u32.u64.compose %v1459, %v1454
    %v1464 = vextract.low.u32 %v1463
    %v1465 = vextract.high.u32 %v1463
    %v1466 = vmul.u32 %v1459, %v1450
    %v1467 = vadd.s32 %v1462, %v1464
    %vm1468 = vc.u32 %v1462, %v1464
    %v1469 = vadd.s32 %v1465, 1
    %v1470 = vsel %vm1468, %v1469, %v1465
    %v1471 = vadd.s32 %v1466, %v1470
    %v1472 = vadd.s32 %v1471, 536870912
    %v1473 = vshrl.u32 %v1472, 30
    %v1474 = vshll.u32 %v1473, 30
    %v1475 = vsub.s32 %v1471, %v1474
    %vm1476 = vcmp.lt.s32.totalorder %v1475, 0
    %v1477 = vsub.s32 0, %v1475
    %v1478 = vsel %vm1476, %v1477, %v1475
    %v1479 = vclz %v1478
    %v1480 = vsub.s32 %v1479, 2
    %vm1481 = vcmp.gt.s32.totalorder 0, %v1480
    %v1482 = vsel %vm1481, 0, %v1480
    %v1483 = vsub.s32 32, %v1482
    %v1484 = vshll.u32 %v1475, %v1482
    %v1485 = vshrl.u32 %v1467, %v1483
    %v1486 = vor.u32 %v1484, %v1485
    %v1487 = vsub.s32 4294967266, %v1482
    %v1488 = vadd.s32 %v1487, 127
    %v1489 = vshll.u32 %v1488, 23
    %v1490 = vor.u32 4788187, %v1489
    %v1491 = vand.u32 2147483647, %v1490
    %v1493 = vcvt.s32.f32 %v1486
    %v1494 = vmul.f32 %v1493, %v1491
    %v1495 = vxor.u32 %v1494, 2147483648
    %v1496 = vsel %vm1413, %v1495, %v1494
    %v1497 = vsub.s32 4, %v1473
    %v1498 = vsel %vm1413, %v1497, %v1473
    %v1499 = vsel %vm1412, %v1195, %v1496
    %v1500 = vsel %vm1412, 0, %v1498
    %v1501 = vcosq.f32.pop %v1499
    %v1502 = vsinq.f32.pop %v1499
    %vm1503 = vweird.f32 %v1195
    %v1504 = vadd.s32 %v1500, 3
    %v1505 = vand.u32 %v1504, 3
    %vm1506 = vcmp.lt.s32.totalorder %v1505, 2
    %vm1507 = vcmp.eq.s32.totalorder %v1505, 0
    %v1508 = vxor.u32 %v1502, 2147483648
    %v1509 = vsel %vm1507, %v1501, %v1508
    %vm1510 = vcmp.eq.s32.totalorder %v1505, 2
    %v1511 = vxor.u32 %v1501, 2147483648
    %v1512 = vsel %vm1510, %v1511, %v1502
    %v1513 = vsel %vm1506, %v1509, %v1512
    %v1514 = vsel %vm1503, nan, %v1513
    %v1515 = vand.u32 2147483647, %v1200
    %vm1516 = vcmp.le.f32.partialorder %v1515, 0.7853982
    %vm1517 = vcmp.lt.s32.totalorder %v1200, 0
    %v1518 = vand.u32 %v1200, 2139095040
    %v1519 = vshrl.u32 %v1518, 23
    %v1520 = vsub.s32 %v1519, 127
    %v1521 = vand.u32 2147483647, %v1200
    %v1522 = vand.u32 %v1521, 8388607
    %v1523 = vor.u32 %v1522, 8388608
    %v1524 = vsub.s32 0, %v1523
    %v1525 = vadd.s32 %v1520, 1
    %vm1526 = vcmp.gt.s32.totalorder %v1525, 0
    %v1527 = vsel %vm1526, %v1525, 0
    %v1528 = vshrl.u32 %v1527, 5
    %v1529 = vand.u32 %v1527, 31
    %v1530 = vsub.s32 32, %v1529
    %v1531 = vshrl.u32 683565275, %v1530
    %v1532 = vshll.u32 683565275, %v1529
    %v1533 = vshrl.u32 2475754826, %v1530
    %v1534 = vor.u32 %v1532, %v1533
    %v1535 = vshll.u32 2475754826, %v1529
    %v1536 = vshrl.u32 2131351028, %v1530
    %v1537 = vor.u32 %v1535, %v1536
    %v1538 = vshll.u32 2131351028, %v1529
    %v1539 = vshrl.u32 2102212464, %v1530
    %v1540 = vor.u32 %v1538, %v1539
    %v1541 = vshll.u32 2102212464, %v1529
    %v1542 = vshrl.u32 920167782, %v1530
    %v1543 = vor.u32 %v1541, %v1542
    %v1544 = vshll.u32 920167782, %v1529
    %v1545 = vshrl.u32 1326507024, %v1530
    %v1546 = vor.u32 %v1544, %v1545
    %vm1547 = vcmp.lt.s32.totalorder %v1528, 1
    %vm1548 = vcmp.lt.s32.totalorder %v1528, 2
    %vm1549 = vcmp.lt.s32.totalorder %v1528, 3
    %vm1550 = vcmp.lt.s32.totalorder %v1528, 4
    %v1551 = vsel %vm1547, %v1531, %v1534
    %v1552 = vsel %vm1550, %v1540, 2102212464
    %v1553 = vsel %vm1549, %v1537, %v1552
    %v1554 = vsel %vm1548, %v1551, %v1553
    %v1555 = vsel %vm1547, %v1534, %v1537
    %v1556 = vsel %vm1550, %v1543, 920167782
    %v1557 = vsel %vm1549, %v1540, %v1556
    %v1558 = vsel %vm1548, %v1555, %v1557
    %v1559 = vsel %vm1547, %v1537, %v1540
    %v1560 = vsel %vm1550, %v1546, 1326507024
    %v1561 = vsel %vm1549, %v1543, %v1560
    %v1562 = vsel %vm1548, %v1559, %v1561
    %v1563 = vshll.u32 %v1523, 8
    %v1564 = vmul.u32.u64.compose %v1563, %v1562
    %v1565 = vextract.low.u32 %v1564
    %v1566 = vextract.high.u32 %v1564
    %v1567 = vmul.u32.u64.compose %v1563, %v1558
    %v1568 = vextract.low.u32 %v1567
    %v1569 = vextract.high.u32 %v1567
    %v1570 = vmul.u32 %v1563, %v1554
    %v1571 = vadd.s32 %v1566, %v1568
    %vm1572 = vc.u32 %v1566, %v1568
    %v1573 = vadd.s32 %v1569, 1
    %v1574 = vsel %vm1572, %v1573, %v1569
    %v1575 = vadd.s32 %v1570, %v1574
    %v1576 = vadd.s32 %v1575, 536870912
    %v1577 = vshrl.u32 %v1576, 30
    %v1578 = vshll.u32 %v1577, 30
    %v1579 = vsub.s32 %v1575, %v1578
    %vm1580 = vcmp.lt.s32.totalorder %v1579, 0
    %v1581 = vsub.s32 0, %v1579
    %v1582 = vsel %vm1580, %v1581, %v1579
    %v1583 = vclz %v1582
    %v1584 = vsub.s32 %v1583, 2
    %vm1585 = vcmp.gt.s32.totalorder 0, %v1584
    %v1586 = vsel %vm1585, 0, %v1584
    %v1587 = vsub.s32 32, %v1586
    %v1588 = vshll.u32 %v1579, %v1586
    %v1589 = vshrl.u32 %v1571, %v1587
    %v1590 = vor.u32 %v1588, %v1589
    %v1591 = vsub.s32 4294967266, %v1586
    %v1592 = vadd.s32 %v1591, 127
    %v1593 = vshll.u32 %v1592, 23
    %v1594 = vor.u32 4788187, %v1593
    %v1595 = vand.u32 2147483647, %v1594
    %v1597 = vcvt.s32.f32 %v1590
    %v1598 = vmul.f32 %v1597, %v1595
    %v1599 = vxor.u32 %v1598, 2147483648
    %v1600 = vsel %vm1517, %v1599, %v1598
    %v1601 = vsub.s32 4, %v1577
    %v1602 = vsel %vm1517, %v1601, %v1577
    %v1603 = vsel %vm1516, %v1200, %v1600
    %v1604 = vsel %vm1516, 0, %v1602
    %v1605 = vcosq.f32.pop %v1603
    %v1606 = vsinq.f32.pop %v1603
    %vm1607 = vweird.f32 %v1200
    %v1608 = vadd.s32 %v1604, 3
    %v1609 = vand.u32 %v1608, 3
    %vm1610 = vcmp.lt.s32.totalorder %v1609, 2
    %vm1611 = vcmp.eq.s32.totalorder %v1609, 0
    %v1612 = vxor.u32 %v1606, 2147483648
    %v1613 = vsel %vm1611, %v1605, %v1612
    %vm1614 = vcmp.eq.s32.totalorder %v1609, 2
    %v1615 = vxor.u32 %v1605, 2147483648
    %v1616 = vsel %vm1614, %v1615, %v1606
    %v1617 = vsel %vm1610, %v1613, %v1616
    %v1618 = vsel %vm1607, nan, %v1617
    %v1619 = vld [vmem:[%s5] sm:$0xff]
    %v1620 = vld [vmem:[%s5 + $0x8] sm:$0xff]
    %v1621 = vld [vmem:[%s5 + $0x10] sm:$0xff]
    %v1622 = vld [vmem:[%s5 + $0x18] sm:$0xff]
    %1624 = vset.pattern.permute.xlu0 0
    %1625 = vperm.xlu0 %1624, %v1619
    %v1626 = vpop.permute.xlu0 %1625
    %1629 = vset.pattern.permute.xlu0 0
    %1630 = vperm.xlu0 %1629, %v1620
    %v1631 = vpop.permute.xlu0 %1630
    %1634 = vset.pattern.permute.xlu0 0
    %1635 = vperm.xlu0 %1634, %v1621
    %v1636 = vpop.permute.xlu0 %1635
    %1639 = vset.pattern.permute.xlu0 0
    %1640 = vperm.xlu0 %1639, %v1622
    %v1641 = vpop.permute.xlu0 %1640
    %v1643 = vmul.f32 %v1306, %v1626
    %v1644 = vmul.f32 %v1410, %v1631
    %v1645 = vmul.f32 %v1514, %v1636
    %v1646 = vmul.f32 %v1618, %v1641
    %v1647 = vadd.f32 %v1643, %v1644
    %v1648 = vadd.f32 %v1647, %v1645
    %v1649 = vadd.f32 %v1648, %v1646
    %v1650 = vrot.slane %v1649, 4
    %v1651 = vadd.f32 %v1649, %v1650
    %v1652 = vrot.slane %v1651, 2
    %v1653 = vadd.f32 %v1651, %v1652
    %v1654 = vrot.slane %v1653, 1
    %v1655 = vadd.f32 %v1653, %v1654
    %v1656 = vld [vmem:[#allocation2] sm:$0x1]
    %1658 = vset.pattern.permute.xlu0 0
    %1659 = vperm.xlu0 %1658, %v1656
    %v1660 = vpop.permute.xlu0 %1659
    %v1662 = vlaneseq
    %v1663 = vshrl.u32 %v1662, 7
    %v1664 = vsub.s32 0, %v1663
    %v1665 = vrot.slane %v1660, %v1664
    %v1666 = vadd.f32 %v1655, %v1665
    %1667 = vst [vmem:[#allocation3] sm:$0x1] %v1666
    // Predicated region
    $region30: #{tpu_custom_call.1} parent=1 // pred_check
      _
    $region31: #{tpu_custom_call.1} parent=1 // pred_check_branch
      %1669 = sbr.rel (0) target = $region33
    $region32: #{tpu_custom_call.1} parent=1 // pred_region
      %s1671 = ssub.s32 16, 16
      %1672 = vsyncadd [#allocation4], %s1671
      %s1674 = sshll.u32 [#allocation3], 4
      %s1675 = int_to_ptr.vmem [resolvable:$true] %s1674
      %1677 = dma.vmem_to_hbm [thread:$0]  %s1675, 16, %s7, [#allocation4]
    $region33: #{tpu_custom_call.1} parent=1 // pred_fallthru
      _
    // Predicated region
    $region34: #{tpu_custom_call.1} parent=1 // pred_check
      _
    $region35: #{tpu_custom_call.1} parent=1 // pred_check_branch
      %1679 = sbr.rel (0) target = $region37
    $region36: #{tpu_custom_call.1} parent=1 // pred_region
      %1680 = dma.done [#allocation4], 16
    $region37: #{tpu_custom_call.1} parent=1 // pred_fallthru
      _
    %1681 = vsyncpa [#allocation4], 1

</llo_original>
